<compile_context>
chip_gen: v7x
topology: tpu7x:2x2x1
jax: 0.10.0
libtpu: 0.0.40
codegen_flags: <defaults>
</compile_context>

<pallas_src>
import functools

import jax
import jax.numpy as jnp
from jax.experimental import pallas as pl
from jax.experimental.pallas import tpu as pltpu

_LANE = 128
_VMEM_LIMIT_BYTES = 48 * 1024 * 1024          # sized for v7x's 64 MiB; >> v5e/v6e scoped default
_RESIDENT_SUPPORT_BYTES = 12 * 1024 * 1024    # keep support VMEM-resident below this size


def _round_up(x, m):
    return ((x + m - 1) // m) * m


def _choose_tiles(n):
    """Round N up so a large lane-dense tile always divides it; keep >= 2 row tiles (v7x 2 TC)."""
    tile = 512 if n >= 1024 else 256
    n_pad = _round_up(n, tile)
    tile_m = tile
    while n_pad // tile_m < 2 and tile_m > _LANE:
        tile_m //= 2
    tile_k = tile
    return n_pad, tile_m, tile_k


# --------------------------------------------------------------------------------------
# Kernels
# --------------------------------------------------------------------------------------


def _support_kernel(*refs, prenorm):
    """support = [relu(x*scale + shift)] @ W^T + b  (prenorm fuses prev layer's BN+ReLU)."""
    if prenorm:
        x_ref, wt_ref, b_ref, scale_ref, shift_ref, out_ref = refs
        x = jnp.maximum(x_ref[...] * scale_ref[...] + shift_ref[...], 0.0)
    else:
        x_ref, wt_ref, b_ref, out_ref = refs
        x = x_ref[...]
    out_ref[...] = (jnp.dot(x, wt_ref[...], preferred_element_type=jnp.float32)
                    + b_ref[...]).astype(out_ref.dtype)


def _aggregate_kernel(adj_ref, sup_ref, agg_ref, sum_ref, ssq_ref, *, resident, tile_k):
    """agg = adj @ support, accumulated directly into the K-resident f32 output block.

    At the last K step, per-feature partial sum / sum-of-squares (for global BatchNorm
    statistics) are written into row 0 of an (8, H) stats block (rows 1..7 stay zero
    from the k==0 init).  NOTE: the stats outputs are only valid because their block
    index is constant across the K (reduction) axis and K is the innermost, "arbitrary"
    grid dimension.
    """
    k = pl.program_id(1)

    @pl.when(k == 0)
    def _():
        agg_ref[...] = jnp.zeros_like(agg_ref)
        sum_ref[...] = jnp.zeros_like(sum_ref)
        ssq_ref[...] = jnp.zeros_like(ssq_ref)

    if resident:
        start = pl.multiple_of(k * tile_k, tile_k)
        s = sup_ref[pl.ds(start, tile_k), :]
    else:
        s = sup_ref[...]
    agg_ref[...] += jnp.dot(adj_ref[...], s, preferred_element_type=jnp.float32)

    @pl.when(k == pl.num_programs(1) - 1)
    def _():
        acc = agg_ref[...]
        sum_ref[0:1, :] = jnp.sum(acc, axis=0, keepdims=True)
        ssq_ref[0:1, :] = jnp.sum(acc * acc, axis=0, keepdims=True)


def _normalize_kernel(agg_ref, scale_ref, shift_ref, out_ref):
    """Final-layer BatchNorm as a single FMA (no ReLU)."""
    out_ref[...] = (agg_ref[...] * scale_ref[...] + shift_ref[...]).astype(out_ref.dtype)


# --------------------------------------------------------------------------------------
# pallas_call wrappers
# --------------------------------------------------------------------------------------


def _support_call(x, wt, b, scale, shift, *, tile_m, out_dtype):
    n_pad, f_pad = x.shape
    h_pad = wt.shape[1]
    prenorm = scale is not None
    in_specs = [
        pl.BlockSpec((tile_m, f_pad), lambda i: (i, 0)),
        pl.BlockSpec((f_pad, h_pad), lambda i: (0, 0)),
        pl.BlockSpec((1, h_pad), lambda i: (0, 0)),
    ]
    args = [x, wt, b]
    if prenorm:
        in_specs += [pl.BlockSpec((1, f_pad), lambda i: (0, 0)),
                     pl.BlockSpec((1, f_pad), lambda i: (0, 0))]
        args += [scale, shift]
    kernel = functools.partial(_support_kernel, prenorm=prenorm)
    return pl.pallas_call(
        kernel,
        out_shape=jax.ShapeDtypeStruct((n_pad, h_pad), out_dtype),
        grid=(n_pad // tile_m,),
        in_specs=in_specs,
        out_specs=pl.BlockSpec((tile_m, h_pad), lambda i: (i, 0)),
        compiler_params=pltpu.CompilerParams(
            dimension_semantics=("parallel",),
            vmem_limit_bytes=_VMEM_LIMIT_BYTES),
    )(*args)


def _aggregate_call(adj, sup, *, tile_m, tile_k):
    n_pad = adj.shape[0]
    h_pad = sup.shape[1]
    rt = n_pad // tile_m
    kt = n_pad // tile_k

    sup_bytes = n_pad * h_pad * jnp.dtype(sup.dtype).itemsize
    resident = sup_bytes <= _RESIDENT_SUPPORT_BYTES
    if resident:
        sup_spec = pl.BlockSpec((n_pad, h_pad), lambda i, k: (0, 0))   # single DMA, sliced in-kernel
    else:
        sup_spec = pl.BlockSpec((tile_k, h_pad), lambda i, k: (k, 0))  # streamed per K step

    kernel = functools.partial(_aggregate_kernel, resident=resident, tile_k=tile_k)
    return pl.pallas_call(
        kernel,
        out_shape=(
            jax.ShapeDtypeStruct((n_pad, h_pad), jnp.float32),     # agg (f32: K-accumulated in place)
            jax.ShapeDtypeStruct((rt * 8, h_pad), jnp.float32),    # partial sums
            jax.ShapeDtypeStruct((rt * 8, h_pad), jnp.float32),    # partial sum-of-squares
        ),
        grid=(rt, kt),
        in_specs=[
            pl.BlockSpec((tile_m, tile_k), lambda i, k: (i, k)),   # adj tile (bf16 stream)
            sup_spec,
        ],
        out_specs=(
            pl.BlockSpec((tile_m, h_pad), lambda i, k: (i, 0)),
            pl.BlockSpec((8, h_pad), lambda i, k: (i, 0)),
            pl.BlockSpec((8, h_pad), lambda i, k: (i, 0)),
        ),
        compiler_params=pltpu.CompilerParams(
            dimension_semantics=("parallel", "arbitrary"),
            vmem_limit_bytes=_VMEM_LIMIT_BYTES),
    )(adj, sup)


def _normalize_call(agg, scale, shift, *, tile_m):
    n_pad, h_pad = agg.shape
    return pl.pallas_call(
        _normalize_kernel,
        out_shape=jax.ShapeDtypeStruct((n_pad, h_pad), jnp.float32),
        grid=(n_pad // tile_m,),
        in_specs=[
            pl.BlockSpec((tile_m, h_pad), lambda i: (i, 0)),
            pl.BlockSpec((1, h_pad), lambda i: (0, 0)),
            pl.BlockSpec((1, h_pad), lambda i: (0, 0)),
        ],
        out_specs=pl.BlockSpec((tile_m, h_pad), lambda i: (i, 0)),
        compiler_params=pltpu.CompilerParams(
            dimension_semantics=("parallel",),
            vmem_limit_bytes=_VMEM_LIMIT_BYTES),
    )(agg, scale, shift)


# --------------------------------------------------------------------------------------
# Parameter init (mirrors the PyTorch __init__) and one-time prep (padded / transposed / cast)
# --------------------------------------------------------------------------------------


def _xavier_uniform(key, out_features, in_features):
    bound = (6.0 / (in_features + out_features)) ** 0.5
    return jax.random.uniform(key, (out_features, in_features),
                              minval=-bound, maxval=bound, dtype=jnp.float32)


def init_improved_gcn(key, nfeat, nhid, nclass, n_layers=2):
    params = {"layers": [], "output": None}
    dims = [(nfeat if i == 0 else nhid, nhid) for i in range(n_layers - 1)]
    for (fin, fout) in dims:
        key, sub = jax.random.split(key)
        params["layers"].append({
            "w": _xavier_uniform(sub, fout, fin),        # (out, in), PyTorch layout
            "b": jnp.zeros((fout,), jnp.float32),        # nn.init.zeros_
            "gamma": jnp.ones((fout,), jnp.float32),     # BN defaults
            "beta": jnp.zeros((fout,), jnp.float32),
        })
    key, sub = jax.random.split(key)
    params["output"] = {
        "w": _xavier_uniform(sub, nclass, nhid),
        "b": jnp.zeros((nclass,), jnp.float32),
        "gamma": jnp.ones((nclass,), jnp.float32),
        "beta": jnp.zeros((nclass,), jnp.float32),
    }
    return params


def prepare_params(params):
    """Pad/transpose once at init time: W^T (fin_pad, fout_pad), b/gamma/beta lane-padded."""
    def prep(p):
        w = p["w"]
        out_f, in_f = w.shape
        fin_p = _round_up(in_f, _LANE)
        fout_p = _round_up(out_f, _LANE)
        wt = jnp.zeros((fin_p, fout_p), jnp.float32).at[:in_f, :out_f].set(w.T)
        b = jnp.zeros((1, fout_p), jnp.float32).at[0, :out_f].set(p["b"])
        gamma = jnp.zeros((fout_p,), jnp.float32).at[:out_f].set(p["gamma"])  # 0 in pad cols
        beta = jnp.zeros((fout_p,), jnp.float32).at[:out_f].set(p["beta"])
        return {"wt": wt, "b": b, "gamma": gamma, "beta": beta, "out_features": out_f}
    return {"layers": [prep(p) for p in params["layers"]],
            "output": prep(params["output"])}


def prepare_graph(adj, *, bf16_adj=True):
    """One-time adjacency prep: pad to the tile-aligned size and cast to bf16 (f32 accumulate
    happens in the kernel).  Hoisted out of the jitted forward so the N^2 pad/cast is never
    on the per-call critical path."""
    n = adj.shape[0]
    n_pad, tile_m, tile_k = _choose_tiles(n)
    dt = jnp.bfloat16 if bf16_adj else jnp.float32
    adj_p = jnp.zeros((n_pad, n_pad), dt).at[:n, :n].set(adj.astype(dt))
    return {"adj": adj_p, "n": n, "n_pad": n_pad, "tile_m": tile_m, "tile_k": tile_k}


# --------------------------------------------------------------------------------------
# Forward
# --------------------------------------------------------------------------------------


def improved_gcn_forward(x, graph, prepped, *, eps=1e-5):
    adj_p = graph["adj"]
    n, n_pad = graph["n"], graph["n_pad"]
    tile_m, tile_k = graph["tile_m"], graph["tile_k"]
    assert n_pad % tile_m == 0 and n_pad % tile_k == 0
    bf16 = adj_p.dtype == jnp.bfloat16
    act_dtype = jnp.bfloat16 if bf16 else jnp.float32   # inter-kernel support activations

    nfeat = x.shape[1]
    fin_pad = _round_up(nfeat, _LANE)
    x_p = jnp.zeros((n_pad, fin_pad), jnp.float32).at[:n, :nfeat].set(x)

    layers = list(prepped["layers"]) + [prepped["output"]]
    h = x_p
    scale = shift = None
    for p in layers:
        # Linear (with previous layer's BN+ReLU fused in as a prenorm when available).
        sup = _support_call(h, p["wt"], p["b"], scale, shift,
                            tile_m=tile_m, out_dtype=act_dtype)
        # adj @ support, with fused partial BN statistics.
        agg, psum, pssq = _aggregate_call(adj_p, sup, tile_m=tile_m, tile_k=tile_k)
        total = jnp.sum(psum, axis=0)
        total_sq = jnp.sum(pssq, axis=0)
        mean = total / n                                       # real N, not padded
        var = jnp.maximum(total_sq / n - mean * mean, 0.0)     # biased variance, clamped
        scale_v = p["gamma"] * jax.lax.rsqrt(var + eps)
        shift_v = p["beta"] - mean * scale_v
        scale = scale_v.reshape(1, -1)
        shift = shift_v.reshape(1, -1)
        h = agg                                                # f32 (K-accumulated in place)
        # TODO(synk): F.dropout between hidden layers treated as identity (inference mode).

    out = _normalize_call(h, scale, shift, tile_m=tile_m)      # final BN, no ReLU
    nclass = prepped["output"]["out_features"]
    return out[:n, :nclass]


# --------------------------------------------------------------------------------------
# Pure-JAX reference for the correctness check
# --------------------------------------------------------------------------------------


def _ref_layer(x, adj, p, apply_relu, eps=1e-5):
    support = x @ p["w"].T + p["b"]
    agg = adj @ support
    mean = jnp.mean(agg, axis=0, keepdims=True)
    var = jnp.mean((agg - mean) ** 2, axis=0, keepdims=True)
    y = (agg - mean) / jnp.sqrt(var + eps) * p["gamma"] + p["beta"]
    return jnp.maximum(y, 0.0) if apply_relu else y


def _ref_forward(x, adj, params):
    for p in params["layers"]:
        x = _ref_layer(x, adj, p, True)
    return _ref_layer(x, adj, params["output"], False)


if __name__ == "__main__":
    key = jax.random.PRNGKey(0)
    N, NFEAT, NHID, NCLASS = 64, 32, 32, 16

    k_x, k_adj, k_p = jax.random.split(key, 3)
    x = jax.random.normal(k_x, (N, NFEAT), dtype=jnp.float32)

    # Symmetric, self-looped, D^{-1/2} A D^{-1/2}-normalized adjacency.
    a = (jax.random.uniform(k_adj, (N, N)) < 0.15).astype(jnp.float32)
    a = jnp.maximum(a, a.T)
    a = a + jnp.eye(N, dtype=jnp.float32)
    deg = jnp.sum(a, axis=1)
    d_inv_sqrt = 1.0 / jnp.sqrt(deg)
    adj = a * d_inv_sqrt[:, None] * d_inv_sqrt[None, :]

    params = init_improved_gcn(k_p, NFEAT, NHID, NCLASS, n_layers=2)
    prepped = prepare_params(params)
    graph = prepare_graph(adj, bf16_adj=True)   # one-time pad + bf16 cast of adj

    fwd = jax.jit(lambda xx: improved_gcn_forward(xx, graph, prepped))
    out = jax.block_until_ready(fwd(x))

    ref = jax.block_until_ready(_ref_forward(x, adj, params))
    assert out.shape == (N, NCLASS)
    assert jnp.allclose(out.astype(jnp.float32), ref, rtol=2e-2, atol=2e-2), \
        "Pallas output mismatch vs reference"

    print("KERNEL_OK")
</pallas_src>

<mosaic_0001>
module attributes {stable_mosaic.version = 11 : i64} {
  func.func @_support_kernel(%arg0: i32, %arg1: memref<128x128xf32, #tpu.memory_space<vmem>>, %arg2: memref<128x128xf32, #tpu.memory_space<vmem>>, %arg3: memref<1x128xf32, #tpu.memory_space<vmem>>, %arg4: memref<128x128xbf16, #tpu.memory_space<vmem>>) attributes {dimension_semantics = [#tpu.dimension_semantics<parallel>], iteration_bounds = array<i64: 2>, scalar_prefetch = 0 : i64, scratch_operands = 0 : i64, tpu.core_type = #tpu.core_type<tc>, window_params = [{transform_indices = @transform_0, window_bounds = array<i64: 128, 128>}, {pipeline_mode = #tpu.pipeline_mode<synchronous>, transform_indices = @transform_1, window_bounds = array<i64: 128, 128>}, {pipeline_mode = #tpu.pipeline_mode<synchronous>, transform_indices = @transform_2, window_bounds = array<i64: 1, 128>}, {transform_indices = @transform_3, window_bounds = array<i64: 128, 128>}]} {
    %c0 = arith.constant 0 : index
    %c0_0 = arith.constant 0 : index
    %0 = vector.load %arg1[%c0, %c0_0] : memref<128x128xf32, #tpu.memory_space<vmem>>, vector<128x128xf32>
    %c0_1 = arith.constant 0 : index
    %c0_2 = arith.constant 0 : index
    %1 = vector.load %arg2[%c0_1, %c0_2] : memref<128x128xf32, #tpu.memory_space<vmem>>, vector<128x128xf32>
    %cst = arith.constant dense<0.000000e+00> : vector<128x128xf32>
    %2 = tpu.matmul %0, %1, %cst {dimension_numbers = #tpu.dot_dimension_numbers<[1], [0], [0], [1], [0, 0, 1, 1], [], []>} : vector<128x128xf32>, vector<128x128xf32>, vector<128x128xf32> -> vector<128x128xf32>
    %c0_3 = arith.constant 0 : index
    %c0_4 = arith.constant 0 : index
    %3 = vector.load %arg3[%c0_3, %c0_4] : memref<1x128xf32, #tpu.memory_space<vmem>>, vector<1x128xf32>
    %4 = vector.broadcast %3 : vector<1x128xf32> to vector<128x128xf32>
    %5 = arith.addf %2, %4 : vector<128x128xf32>
    %6 = arith.truncf %5 : vector<128x128xf32> to vector<128x128xbf16>
    %c0_5 = arith.constant 0 : index
    %c0_6 = arith.constant 0 : index
    %7 = vector.load %arg4[%c0_5, %c0_6] : memref<128x128xbf16, #tpu.memory_space<vmem>>, vector<128x128xbf16>
    tpu.vector_store %arg4[%c0_5, %c0_6], %6 {strides = array<i32>} : memref<128x128xbf16, #tpu.memory_space<vmem>>, vector<128x128xbf16>,
    return
  }
  func.func @transform_0(%arg0: i32) -> (i32, i32) {
    %c0_i32 = arith.constant 0 : i32
    %c0_i32_0 = arith.constant 0 : i32
    return %arg0, %c0_i32 : i32, i32
  }
  func.func @transform_1(%arg0: i32) -> (i32, i32) {
    %c0_i32 = arith.constant 0 : i32
    %c0_i32_0 = arith.constant 0 : i32
    %c0_i32_1 = arith.constant 0 : i32
    return %c0_i32, %c0_i32_0 : i32, i32
  }
  func.func @transform_2(%arg0: i32) -> (i32, i32) {
    %c0_i32 = arith.constant 0 : i32
    %c0_i32_0 = arith.constant 0 : i32
    %c0_i32_1 = arith.constant 0 : i32
    return %c0_i32, %c0_i32_0 : i32, i32
  }
  func.func @transform_3(%arg0: i32) -> (i32, i32) {
    %c0_i32 = arith.constant 0 : i32
    %c0_i32_0 = arith.constant 0 : i32
    return %arg0, %c0_i32 : i32, i32
  }
}

module attributes {stable_mosaic.version = 11 : i64} {
  func.func @_aggregate_kernel(%arg0: i32, %arg1: i32, %arg2: memref<128x256xbf16, #tpu.memory_space<vmem>>, %arg3: memref<256x128xbf16, #tpu.memory_space<vmem>>, %arg4: memref<128x128xf32, #tpu.memory_space<vmem>>, %arg5: memref<8x128xf32, #tpu.memory_space<vmem>>, %arg6: memref<8x128xf32, #tpu.memory_space<vmem>>) attributes {dimension_semantics = [#tpu.dimension_semantics<parallel>, #tpu.dimension_semantics<arbitrary>], iteration_bounds = array<i64: 2, 1>, scalar_prefetch = 0 : i64, scratch_operands = 0 : i64, tpu.core_type = #tpu.core_type<tc>, window_params = [{transform_indices = @transform_0, window_bounds = array<i64: 128, 256>}, {pipeline_mode = #tpu.pipeline_mode<synchronous>, transform_indices = @transform_1, window_bounds = array<i64: 256, 128>}, {transform_indices = @transform_2, window_bounds = array<i64: 128, 128>}, {transform_indices = @transform_3, window_bounds = array<i64: 8, 128>}, {transform_indices = @transform_4, window_bounds = array<i64: 8, 128>}]} {
    %c0_i32 = arith.constant 0 : i32
    %0 = arith.cmpi eq, %arg1, %c0_i32 : i32
    %1 = arith.extui %0 : i1 to i32
    %c0_i32_0 = arith.constant 0 : i32
    %2 = arith.cmpi ne, %1, %c0_i32_0 : i32
    scf.if %2 {
      %cst_9 = arith.constant 0.000000e+00 : f32
      %15 = vector.broadcast %cst_9 : f32 to vector<128x128xf32>
      %c0_10 = arith.constant 0 : index
      %c0_11 = arith.constant 0 : index
      %16 = vector.load %arg4[%c0_10, %c0_11] : memref<128x128xf32, #tpu.memory_space<vmem>>, vector<128x128xf32>
      tpu.vector_store %arg4[%c0_10, %c0_11], %15 {strides = array<i32>} : memref<128x128xf32, #tpu.memory_space<vmem>>, vector<128x128xf32>,
      %cst_12 = arith.constant 0.000000e+00 : f32
      %17 = vector.broadcast %cst_12 : f32 to vector<8x128xf32>
      %c0_13 = arith.constant 0 : index
      %c0_14 = arith.constant 0 : index
      %18 = vector.load %arg5[%c0_13, %c0_14] : memref<8x128xf32, #tpu.memory_space<vmem>>, vector<8x128xf32>
      tpu.vector_store %arg5[%c0_13, %c0_14], %17 {strides = array<i32>} : memref<8x128xf32, #tpu.memory_space<vmem>>, vector<8x128xf32>,
      %cst_15 = arith.constant 0.000000e+00 : f32
      %19 = vector.broadcast %cst_15 : f32 to vector<8x128xf32>
      %c0_16 = arith.constant 0 : index
      %c0_17 = arith.constant 0 : index
      %20 = vector.load %arg6[%c0_16, %c0_17] : memref<8x128xf32, #tpu.memory_space<vmem>>, vector<8x128xf32>
      tpu.vector_store %arg6[%c0_16, %c0_17], %19 {strides = array<i32>} : memref<8x128xf32, #tpu.memory_space<vmem>>, vector<8x128xf32>,
    } else {
    }
    %c256_i32 = arith.constant 256 : i32
    %3 = arith.muli %arg1, %c256_i32 : i32
    %4 = tpu.assume_multiple %3, 256 : i32
    %5 = arith.index_cast %4 : i32 to index
    %c0 = arith.constant 0 : index
    %6 = vector.load %arg3[%5, %c0] : memref<256x128xbf16, #tpu.memory_space<vmem>>, vector<256x128xbf16>
    %c0_1 = arith.constant 0 : index
    %c0_2 = arith.constant 0 : index
    %7 = vector.load %arg4[%c0_1, %c0_2] : memref<128x128xf32, #tpu.memory_space<vmem>>, vector<128x128xf32>
    %c0_3 = arith.constant 0 : index
    %c0_4 = arith.constant 0 : index
    %8 = vector.load %arg2[%c0_3, %c0_4] : memref<128x256xbf16, #tpu.memory_space<vmem>>, vector<128x256xbf16>
    %cst = arith.constant dense<0.000000e+00> : vector<128x128xf32>
    %9 = tpu.matmul %8, %6, %cst {dimension_numbers = #tpu.dot_dimension_numbers<[1], [0], [0], [1], [0, 0, 1, 1], [], []>} : vector<128x256xbf16>, vector<256x128xbf16>, vector<128x128xf32> -> vector<128x128xf32>
    %10 = arith.addf %7, %9 : vector<128x128xf32>
    %c0_5 = arith.constant 0 : index
    %c0_6 = arith.constant 0 : index
    %11 = vector.load %arg4[%c0_5, %c0_6] : memref<128x128xf32, #tpu.memory_space<vmem>>, vector<128x128xf32>
    tpu.vector_store %arg4[%c0_5, %c0_6], %10 {strides = array<i32>} : memref<128x128xf32, #tpu.memory_space<vmem>>, vector<128x128xf32>,
    %c0_i32_7 = arith.constant 0 : i32
    %12 = arith.cmpi eq, %arg1, %c0_i32_7 : i32
    %13 = arith.extui %12 : i1 to i32
    %c0_i32_8 = arith.constant 0 : i32
    %14 = arith.cmpi ne, %13, %c0_i32_8 : i32
    scf.if %14 {
      %c0_9 = arith.constant 0 : index
      %c0_10 = arith.constant 0 : index
      %15 = vector.load %arg4[%c0_9, %c0_10] : memref<128x128xf32, #tpu.memory_space<vmem>>, vector<128x128xf32>
      %cst_11 = arith.constant dense<0.000000e+00> : vector<128xf32>
      %16 = vector.multi_reduction <add>, %15, %cst_11 [0] : vector<128x128xf32> to vector<128xf32>
      %17 = vector.shape_cast %16 : vector<128xf32> to vector<1x128xf32>
      %c0_12 = arith.constant 0 : index
      %c0_13 = arith.constant 0 : index
      %18 = vector.load %arg5[%c0_12, %c0_13] : memref<8x128xf32, #tpu.memory_space<vmem>>, vector<1x128xf32>
      tpu.vector_store %arg5[%c0_12, %c0_13], %17 {strides = array<i32>} : memref<8x128xf32, #tpu.memory_space<vmem>>, vector<1x128xf32>,
      %19 = arith.mulf %15, %15 : vector<128x128xf32>
      %cst_14 = arith.constant dense<0.000000e+00> : vector<128xf32>
      %20 = vector.multi_reduction <add>, %19, %cst_14 [0] : vector<128x128xf32> to vector<128xf32>
      %21 = vector.shape_cast %20 : vector<128xf32> to vector<1x128xf32>
      %c0_15 = arith.constant 0 : index
      %c0_16 = arith.constant 0 : index
      %22 = vector.load %arg6[%c0_15, %c0_16] : memref<8x128xf32, #tpu.memory_space<vmem>>, vector<1x128xf32>
      tpu.vector_store %arg6[%c0_15, %c0_16], %21 {strides = array<i32>} : memref<8x128xf32, #tpu.memory_space<vmem>>, vector<1x128xf32>,
    } else {
    }
    return
  }
  func.func @transform_0(%arg0: i32, %arg1: i32) -> (i32, i32) {
    %c0_i32 = arith.constant 0 : i32
    return %arg0, %arg1 : i32, i32
  }
  func.func @transform_1(%arg0: i32, %arg1: i32) -> (i32, i32) {
    %c0_i32 = arith.constant 0 : i32
    %c0_i32_0 = arith.constant 0 : i32
    %c0_i32_1 = arith.constant 0 : i32
    return %c0_i32, %c0_i32_0 : i32, i32
  }
  func.func @transform_2(%arg0: i32, %arg1: i32) -> (i32, i32) {
    %c0_i32 = arith.constant 0 : i32
    %c0_i32_0 = arith.constant 0 : i32
    return %arg0, %c0_i32 : i32, i32
  }
  func.func @transform_3(%arg0: i32, %arg1: i32) -> (i32, i32) {
    %c0_i32 = arith.constant 0 : i32
    %c0_i32_0 = arith.constant 0 : i32
    return %arg0, %c0_i32 : i32, i32
  }
  func.func @transform_4(%arg0: i32, %arg1: i32) -> (i32, i32) {
    %c0_i32 = arith.constant 0 : i32
    %c0_i32_0 = arith.constant 0 : i32
    return %arg0, %c0_i32 : i32, i32
  }
}

module attributes {stable_mosaic.version = 11 : i64} {
  func.func @_support_kernel(%arg0: i32, %arg1: memref<128x128xf32, #tpu.memory_space<vmem>>, %arg2: memref<128x128xf32, #tpu.memory_space<vmem>>, %arg3: memref<1x128xf32, #tpu.memory_space<vmem>>, %arg4: memref<1x128xf32, #tpu.memory_space<vmem>>, %arg5: memref<1x128xf32, #tpu.memory_space<vmem>>, %arg6: memref<128x128xbf16, #tpu.memory_space<vmem>>) attributes {dimension_semantics = [#tpu.dimension_semantics<parallel>], iteration_bounds = array<i64: 2>, scalar_prefetch = 0 : i64, scratch_operands = 0 : i64, tpu.core_type = #tpu.core_type<tc>, window_params = [{transform_indices = @transform_0, window_bounds = array<i64: 128, 128>}, {pipeline_mode = #tpu.pipeline_mode<synchronous>, transform_indices = @transform_1, window_bounds = array<i64: 128, 128>}, {pipeline_mode = #tpu.pipeline_mode<synchronous>, transform_indices = @transform_2, window_bounds = array<i64: 1, 128>}, {pipeline_mode = #tpu.pipeline_mode<synchronous>, transform_indices = @transform_3, window_bounds = array<i64: 1, 128>}, {pipeline_mode = #tpu.pipeline_mode<synchronous>, transform_indices = @transform_4, window_bounds = array<i64: 1, 128>}, {transform_indices = @transform_5, window_bounds = array<i64: 128, 128>}]} {
    %c0 = arith.constant 0 : index
    %c0_0 = arith.constant 0 : index
    %0 = vector.load %arg1[%c0, %c0_0] : memref<128x128xf32, #tpu.memory_space<vmem>>, vector<128x128xf32>
    %c0_1 = arith.constant 0 : index
    %c0_2 = arith.constant 0 : index
    %1 = vector.load %arg4[%c0_1, %c0_2] : memref<1x128xf32, #tpu.memory_space<vmem>>, vector<1x128xf32>
    %2 = vector.broadcast %1 : vector<1x128xf32> to vector<128x128xf32>
    %3 = arith.mulf %0, %2 : vector<128x128xf32>
    %c0_3 = arith.constant 0 : index
    %c0_4 = arith.constant 0 : index
    %4 = vector.load %arg5[%c0_3, %c0_4] : memref<1x128xf32, #tpu.memory_space<vmem>>, vector<1x128xf32>
    %5 = vector.broadcast %4 : vector<1x128xf32> to vector<128x128xf32>
    %6 = arith.addf %3, %5 : vector<128x128xf32>
    %cst = arith.constant 0.000000e+00 : f32
    %7 = vector.broadcast %cst : f32 to vector<128x128xf32>
    %8 = arith.maximumf %6, %7 : vector<128x128xf32>
    %c0_5 = arith.constant 0 : index
    %c0_6 = arith.constant 0 : index
    %9 = vector.load %arg2[%c0_5, %c0_6] : memref<128x128xf32, #tpu.memory_space<vmem>>, vector<128x128xf32>
    %cst_7 = arith.constant dense<0.000000e+00> : vector<128x128xf32>
    %10 = tpu.matmul %8, %9, %cst_7 {dimension_numbers = #tpu.dot_dimension_numbers<[1], [0], [0], [1], [0, 0, 1, 1], [], []>} : vector<128x128xf32>, vector<128x128xf32>, vector<128x128xf32> -> vector<128x128xf32>
    %c0_8 = arith.constant 0 : index
    %c0_9 = arith.constant 0 : index
    %11 = vector.load %arg3[%c0_8, %c0_9] : memref<1x128xf32, #tpu.memory_space<vmem>>, vector<1x128xf32>
    %12 = vector.broadcast %11 : vector<1x128xf32> to vector<128x128xf32>
    %13 = arith.addf %10, %12 : vector<128x128xf32>
    %14 = arith.truncf %13 : vector<128x128xf32> to vector<128x128xbf16>
    %c0_10 = arith.constant 0 : index
    %c0_11 = arith.constant 0 : index
    %15 = vector.load %arg6[%c0_10, %c0_11] : memref<128x128xbf16, #tpu.memory_space<vmem>>, vector<128x128xbf16>
    tpu.vector_store %arg6[%c0_10, %c0_11], %14 {strides = array<i32>} : memref<128x128xbf16, #tpu.memory_space<vmem>>, vector<128x128xbf16>,
    return
  }
  func.func @transform_0(%arg0: i32) -> (i32, i32) {
    %c0_i32 = arith.constant 0 : i32
    %c0_i32_0 = arith.constant 0 : i32
    return %arg0, %c0_i32 : i32, i32
  }
  func.func @transform_1(%arg0: i32) -> (i32, i32) {
    %c0_i32 = arith.constant 0 : i32
    %c0_i32_0 = arith.constant 0 : i32
    %c0_i32_1 = arith.constant 0 : i32
    return %c0_i32, %c0_i32_0 : i32, i32
  }
  func.func @transform_2(%arg0: i32) -> (i32, i32) {
    %c0_i32 = arith.constant 0 : i32
    %c0_i32_0 = arith.constant 0 : i32
    %c0_i32_1 = arith.constant 0 : i32
    return %c0_i32, %c0_i32_0 : i32, i32
  }
  func.func @transform_3(%arg0: i32) -> (i32, i32) {
    %c0_i32 = arith.constant 0 : i32
    %c0_i32_0 = arith.constant 0 : i32
    %c0_i32_1 = arith.constant 0 : i32
    return %c0_i32, %c0_i32_0 : i32, i32
  }
  func.func @transform_4(%arg0: i32) -> (i32, i32) {
    %c0_i32 = arith.constant 0 : i32
    %c0_i32_0 = arith.constant 0 : i32
    %c0_i32_1 = arith.constant 0 : i32
    return %c0_i32, %c0_i32_0 : i32, i32
  }
  func.func @transform_5(%arg0: i32) -> (i32, i32) {
    %c0_i32 = arith.constant 0 : i32
    %c0_i32_0 = arith.constant 0 : i32
    return %arg0, %c0_i32 : i32, i32
  }
}

module attributes {stable_mosaic.version = 11 : i64} {
  func.func @_normalize_kernel(%arg0: i32, %arg1: memref<128x128xf32, #tpu.memory_space<vmem>>, %arg2: memref<1x128xf32, #tpu.memory_space<vmem>>, %arg3: memref<1x128xf32, #tpu.memory_space<vmem>>, %arg4: memref<128x128xf32, #tpu.memory_space<vmem>>) attributes {dimension_semantics = [#tpu.dimension_semantics<parallel>], iteration_bounds = array<i64: 2>, scalar_prefetch = 0 : i64, scratch_operands = 0 : i64, tpu.core_type = #tpu.core_type<tc>, window_params = [{transform_indices = @transform_0, window_bounds = array<i64: 128, 128>}, {pipeline_mode = #tpu.pipeline_mode<synchronous>, transform_indices = @transform_1, window_bounds = array<i64: 1, 128>}, {pipeline_mode = #tpu.pipeline_mode<synchronous>, transform_indices = @transform_2, window_bounds = array<i64: 1, 128>}, {transform_indices = @transform_3, window_bounds = array<i64: 128, 128>}]} {
    %c0 = arith.constant 0 : index
    %c0_0 = arith.constant 0 : index
    %0 = vector.load %arg1[%c0, %c0_0] : memref<128x128xf32, #tpu.memory_space<vmem>>, vector<128x128xf32>
    %c0_1 = arith.constant 0 : index
    %c0_2 = arith.constant 0 : index
    %1 = vector.load %arg2[%c0_1, %c0_2] : memref<1x128xf32, #tpu.memory_space<vmem>>, vector<1x128xf32>
    %2 = vector.broadcast %1 : vector<1x128xf32> to vector<128x128xf32>
    %3 = arith.mulf %0, %2 : vector<128x128xf32>
    %c0_3 = arith.constant 0 : index
    %c0_4 = arith.constant 0 : index
    %4 = vector.load %arg3[%c0_3, %c0_4] : memref<1x128xf32, #tpu.memory_space<vmem>>, vector<1x128xf32>
    %5 = vector.broadcast %4 : vector<1x128xf32> to vector<128x128xf32>
    %6 = arith.addf %3, %5 : vector<128x128xf32>
    %c0_5 = arith.constant 0 : index
    %c0_6 = arith.constant 0 : index
    %7 = vector.load %arg4[%c0_5, %c0_6] : memref<128x128xf32, #tpu.memory_space<vmem>>, vector<128x128xf32>
    tpu.vector_store %arg4[%c0_5, %c0_6], %6 {strides = array<i32>} : memref<128x128xf32, #tpu.memory_space<vmem>>, vector<128x128xf32>,
    return
  }
  func.func @transform_0(%arg0: i32) -> (i32, i32) {
    %c0_i32 = arith.constant 0 : i32
    %c0_i32_0 = arith.constant 0 : i32
    return %arg0, %c0_i32 : i32, i32
  }
  func.func @transform_1(%arg0: i32) -> (i32, i32) {
    %c0_i32 = arith.constant 0 : i32
    %c0_i32_0 = arith.constant 0 : i32
    %c0_i32_1 = arith.constant 0 : i32
    return %c0_i32, %c0_i32_0 : i32, i32
  }
  func.func @transform_2(%arg0: i32) -> (i32, i32) {
    %c0_i32 = arith.constant 0 : i32
    %c0_i32_0 = arith.constant 0 : i32
    %c0_i32_1 = arith.constant 0 : i32
    return %c0_i32, %c0_i32_0 : i32, i32
  }
  func.func @transform_3(%arg0: i32) -> (i32, i32) {
    %c0_i32 = arith.constant 0 : i32
    %c0_i32_0 = arith.constant 0 : i32
    return %arg0, %c0_i32 : i32, i32
  }
}

</mosaic_0001>

<llo_original>
// kernel: _lambda_.7
$region0: #{_lambda_.7}
  #allocation0 [shape = 'u32[]', space=smem, size = 0x4, offset = 0x4, fixed_abs, tag = 'smem constant byte address 0x4 - core index']
  #allocation1 [shape = 'u32[144,128]{1,0:T(1,128)}', space=vmem, size = 0x12000, scoped, tag = 'internal scratch']
  %s0 = inlined_call_operand.vmem [shape: f32[256,128], index: 0, kind: input, shape index: {}]
  %s1 = inlined_call_operand.vmem [shape: f32[128,128], index: 1, kind: input, shape index: {}]
  %s2 = inlined_call_operand.vmem [shape: f32[1,128], index: 2, kind: input, shape index: {}]
  %s3 = inlined_call_operand.vmem [shape: f32[1,128], index: 3, kind: input, shape index: {}]
  %s4 = inlined_call_operand.vmem [shape: f32[1,128], index: 4, kind: input, shape index: {}]
  %s5 = inlined_call_operand.vmem [shape: bf16[256,128], index: 5, kind: output, shape index: {}]
  %s6 = sld [smem:[#allocation0]]
  $region53: #{_lambda_.7} parent=0
    _
  %s8 = ssub.s32 1, %s6
  %s9 = scalar_select 0, %s8, %s6
  loop: start=0, step=1, limit=4
  $region2: #{_lambda_.7} parent=0 // loop_pre_header
    _
  $region3: #{_lambda_.7} parent=0 // loop_header
    %s11 = sphi 0, %s15
    %p12 = scmp.ge.s32.totalorder %s11, 4
    %s21 = sphi 0, %s23
    %s24 = sphi 0, %s21
    %s25 = sphi 0, %s24
    %s41 = sphi 0, %s25
    %s45 = sphi 0, %s45
    %s47 = sphi 0, %s45
    %s48 = sphi 0, %s47
    %s62 = sphi 0, %s48
    %s66 = sphi 0, %s66
    %s68 = sphi 0, %s66
    %s69 = sphi 0, %s68
    %s83 = sphi 0, %s69
    %s87 = sphi 0, %s87
    %s89 = sphi 0, %s87
    %s90 = sphi 0, %s89
    %s104 = sphi 0, %s90
    %s108 = sphi 0, %s108
    %s110 = sphi 0, %s108
    %s111 = sphi 0, %s110
    %s125 = sphi 0, %s111
    %s131 = sphi 0, %s133
    %s134 = sphi 0, %s131
    %s135 = sphi 0, %s134
    %s151 = sphi 0, %s135
  $region4: #{_lambda_.7} parent=0 // loop_header_branch
    %14 = sbr.rel (%p12) target = $region8
  $region5: #{_lambda_.7} parent=0 // loop_body
    %s16 = ssub.s32 %s11, 1
    %s17 = ssub.s32 %s11, 2
    %s18 = sadd.s32 %s11, 1
    %s19 = ssub.s32 %s11, %s18
    %p20 = scmp.eq.s32.totalorder %s19, 0
    %s22 = sadd.s32 %s21, 1
    %s23 = scalar_select %p20, %s21, %s22
    %p26 = pneg %p20
    %p27 = scmp.eq.s32.totalorder %s11, 1
    %p28 = por %p26, %p27
    %p29 = scmp.ne.s32.totalorder %s21, %s24
    %p30 = scmp.eq.s32.totalorder %s11, 0
    %p31 = por %p29, %p30
    %p32 = scmp.ne.s32.totalorder %s21, %s24
    %p33 = scmp.eq.s32.totalorder %s16, 1
    %p34 = por %p32, %p33
    %p35 = scmp.ne.s32.totalorder %s24, %s25
    %p36 = scmp.eq.s32.totalorder %s16, 0
    %p37 = por %p35, %p36
    %p38 = scmp.ne.s32.totalorder %s24, %s25
    %p39 = scmp.eq.s32.totalorder %s17, 1
    %p40 = por %p38, %p39
    %p42 = scmp.ne.s32.totalorder %s25, %s41
    %p43 = scmp.eq.s32.totalorder %s17, 0
    %p44 = por %p42, %p43
    %s46 = sadd.s32 %s45, 1
    %p49 = scmp.eq.s32.totalorder %s11, 1
    %p50 = scmp.ne.s32.totalorder %s45, %s47
    %p51 = scmp.eq.s32.totalorder %s11, 0
    %p52 = por %p50, %p51
    %p53 = scmp.ne.s32.totalorder %s45, %s47
    %p54 = scmp.eq.s32.totalorder %s16, 1
    %p55 = por %p53, %p54
    %p56 = scmp.ne.s32.totalorder %s47, %s48
    %p57 = scmp.eq.s32.totalorder %s16, 0
    %p58 = por %p56, %p57
    %p59 = scmp.ne.s32.totalorder %s47, %s48
    %p60 = scmp.eq.s32.totalorder %s17, 1
    %p61 = por %p59, %p60
    %p63 = scmp.ne.s32.totalorder %s48, %s62
    %p64 = scmp.eq.s32.totalorder %s17, 0
    %p65 = por %p63, %p64
    %s67 = sadd.s32 %s66, 1
    %p70 = scmp.eq.s32.totalorder %s11, 1
    %p71 = scmp.ne.s32.totalorder %s66, %s68
    %p72 = scmp.eq.s32.totalorder %s11, 0
    %p73 = por %p71, %p72
    %p74 = scmp.ne.s32.totalorder %s66, %s68
    %p75 = scmp.eq.s32.totalorder %s16, 1
    %p76 = por %p74, %p75
    %p77 = scmp.ne.s32.totalorder %s68, %s69
    %p78 = scmp.eq.s32.totalorder %s16, 0
    %p79 = por %p77, %p78
    %p80 = scmp.ne.s32.totalorder %s68, %s69
    %p81 = scmp.eq.s32.totalorder %s17, 1
    %p82 = por %p80, %p81
    %p84 = scmp.ne.s32.totalorder %s69, %s83
    %p85 = scmp.eq.s32.totalorder %s17, 0
    %p86 = por %p84, %p85
    %s88 = sadd.s32 %s87, 1
    %p91 = scmp.eq.s32.totalorder %s11, 1
    %p92 = scmp.ne.s32.totalorder %s87, %s89
    %p93 = scmp.eq.s32.totalorder %s11, 0
    %p94 = por %p92, %p93
    %p95 = scmp.ne.s32.totalorder %s87, %s89
    %p96 = scmp.eq.s32.totalorder %s16, 1
    %p97 = por %p95, %p96
    %p98 = scmp.ne.s32.totalorder %s89, %s90
    %p99 = scmp.eq.s32.totalorder %s16, 0
    %p100 = por %p98, %p99
    %p101 = scmp.ne.s32.totalorder %s89, %s90
    %p102 = scmp.eq.s32.totalorder %s17, 1
    %p103 = por %p101, %p102
    %p105 = scmp.ne.s32.totalorder %s90, %s104
    %p106 = scmp.eq.s32.totalorder %s17, 0
    %p107 = por %p105, %p106
    %s109 = sadd.s32 %s108, 1
    %p112 = scmp.eq.s32.totalorder %s11, 1
    %p113 = scmp.ne.s32.totalorder %s108, %s110
    %p114 = scmp.eq.s32.totalorder %s11, 0
    %p115 = por %p113, %p114
    %p116 = scmp.ne.s32.totalorder %s108, %s110
    %p117 = scmp.eq.s32.totalorder %s16, 1
    %p118 = por %p116, %p117
    %p119 = scmp.ne.s32.totalorder %s110, %s111
    %p120 = scmp.eq.s32.totalorder %s16, 0
    %p121 = por %p119, %p120
    %p122 = scmp.ne.s32.totalorder %s110, %s111
    %p123 = scmp.eq.s32.totalorder %s17, 1
    %p124 = por %p122, %p123
    %p126 = scmp.ne.s32.totalorder %s111, %s125
    %p127 = scmp.eq.s32.totalorder %s17, 0
    %p128 = por %p126, %p127
    %s129 = ssub.s32 %s11, %s18
    %p130 = scmp.eq.s32.totalorder %s129, 0
    %s132 = sadd.s32 %s131, 1
    %s133 = scalar_select %p130, %s131, %s132
    %p136 = pneg %p130
    %p137 = scmp.eq.s32.totalorder %s11, 1
    %p138 = por %p136, %p137
    %p139 = scmp.ne.s32.totalorder %s131, %s134
    %p140 = scmp.eq.s32.totalorder %s11, 0
    %p141 = por %p139, %p140
    %p142 = scmp.ne.s32.totalorder %s131, %s134
    %p143 = scmp.eq.s32.totalorder %s16, 1
    %p144 = por %p142, %p143
    %p145 = scmp.ne.s32.totalorder %s134, %s135
    %p146 = scmp.eq.s32.totalorder %s16, 0
    %p147 = por %p145, %p146
    %p148 = scmp.ne.s32.totalorder %s134, %s135
    %p149 = scmp.eq.s32.totalorder %s17, 1
    %p150 = por %p148, %p149
    %p152 = scmp.ne.s32.totalorder %s135, %s151
    %p153 = scmp.eq.s32.totalorder %s17, 0
    %p154 = por %p152, %p153
    %p155 = scmp.le.s32.totalorder 1, %s11
    %p156 = scmp.lt.s32.totalorder %s11, 3
    %p157 = pnand %p155, %p156
    %p158 = pneg %p157
    // Predicated region
    $region9: #{_lambda_.7} parent=5 // pred_check
      _
    $region10: #{_lambda_.7} parent=5 // pred_check_branch
      %160 = sbr.rel (%p157) target = $region12
    $region11: #{_lambda_.7} parent=5 // pred_region
      %s161 = ssub.s32 %s11, 1
      // Predicated region
      $region13: #{_lambda_.7} parent=11 // pred_check
        %p162 = pneg %p58
      $region14: #{_lambda_.7} parent=11 // pred_check_branch
        %164 = sbr.rel (%p162) target = $region16
      $region15: #{_lambda_.7} parent=11 // pred_region
        _
      $region16: #{_lambda_.7} parent=11 // pred_fallthru
        _
      // Predicated region
      $region17: #{_lambda_.7} parent=11 // pred_check
        %p165 = pneg %p79
      $region18: #{_lambda_.7} parent=11 // pred_check_branch
        %167 = sbr.rel (%p165) target = $region20
      $region19: #{_lambda_.7} parent=11 // pred_region
        _
      $region20: #{_lambda_.7} parent=11 // pred_fallthru
        _
      // Predicated region
      $region21: #{_lambda_.7} parent=11 // pred_check
        %p168 = pneg %p100
      $region22: #{_lambda_.7} parent=11 // pred_check_branch
        %170 = sbr.rel (%p168) target = $region24
      $region23: #{_lambda_.7} parent=11 // pred_region
        _
      $region24: #{_lambda_.7} parent=11 // pred_fallthru
        _
      // Predicated region
      $region25: #{_lambda_.7} parent=11 // pred_check
        %p171 = pneg %p121
      $region26: #{_lambda_.7} parent=11 // pred_check_branch
        %173 = sbr.rel (%p171) target = $region28
      $region27: #{_lambda_.7} parent=11 // pred_region
        _
      $region28: #{_lambda_.7} parent=11 // pred_fallthru
        _
    $region12: #{_lambda_.7} parent=5 // pred_fallthru
      _
    %p174 = scmp.lt.s32.totalorder %s11, 2
    // Predicated region
    $region29: #{_lambda_.7} parent=5 // pred_check
      %p175 = pneg %p174
    $region30: #{_lambda_.7} parent=5 // pred_check_branch
      %177 = sbr.rel (%p175) target = $region32
    $region31: #{_lambda_.7} parent=5 // pred_region
      // Predicated region
      $region33: #{_lambda_.7} parent=31 // pred_check
        %p178 = pneg %p31
      $region34: #{_lambda_.7} parent=31 // pred_check_branch
        %180 = sbr.rel (%p178) target = $region36
      $region35: #{_lambda_.7} parent=31 // pred_region
        %s181 = smul.u32 16, %s11
        %p182 = scmp.lt.s32.totalorder %s181, 31
        %s183 = scalar_select %p182, %s181, 31
        %s184 = smul.addr %s183, 8
        %s185 = scalar_lea.vmem %s0, %s184
        %s186 = smul.u32 16, %s11
      $region36: #{_lambda_.7} parent=31 // pred_fallthru
        _
    $region32: #{_lambda_.7} parent=5 // pred_fallthru
      _
    %p187 = scmp.le.s32.totalorder 1, %s11
    %p188 = scmp.lt.s32.totalorder %s11, 3
    %p189 = pnand %p187, %p188
    %p190 = pneg %p189
    // Predicated region
    $region37: #{_lambda_.7} parent=5 // pred_check
      _
    $region38: #{_lambda_.7} parent=5 // pred_check_branch
      %192 = sbr.rel (%p189) target = $region40
    $region39: #{_lambda_.7} parent=5 // pred_region
      %s193 = ssub.s32 %s11, 1
      %s194 = smul.u32 16, %s16
      %p195 = scmp.lt.s32.totalorder %s194, 31
      %s196 = scalar_select %p195, %s194, 31
      %s197 = smul.addr %s196, 8
      %s198 = scalar_lea.vmem %s0, %s197
      %p199 = pneg %p37
      %p200 = pneg %p34
      %p201 = pneg %p58
      %p202 = pneg %p55
      %p203 = pneg %p79
      %p204 = pneg %p76
      %p205 = pneg %p100
      %p206 = pneg %p97
      %p207 = pneg %p121
      %p208 = pneg %p118
      %p209 = pneg %p147
      %p210 = pneg %p144
      %s211 = smul.u32 16, %s16
      %p212 = scmp.lt.s32.totalorder %s211, 31
      %s213 = scalar_select %p212, %s211, 31
      %s214 = smul.addr %s213, 4
      %s215 = scalar_lea.vmem %s5, %s214
      %s216 = smul.u32 16, %s16
      %p217 = scmp.lt.s32.totalorder %s216, 31
      %s218 = scalar_select %p217, %s216, 31
      %s219 = smul.addr %s218, 8
      %s220 = scalar_lea.vmem %s0, %s219
      %s221 = smul.u32 16, %s16
      %s222 = smul.u32 16, %s16
      %p223 = scmp.lt.s32.totalorder %s222, 31
      %s224 = scalar_select %p223, %s222, 31
      %s225 = smul.addr %s224, 4
      %s226 = scalar_lea.vmem %s5, %s225
      %s227 = smul.u32 16, %s16
      %v228 = vld [vmem:[%s220] sm:$0xff]
      %v229 = vld [vmem:[%s220 + $0x8] sm:$0xff]
      %v230 = vld [vmem:[%s220 + $0x10] sm:$0xff]
      %v231 = vld [vmem:[%s220 + $0x18] sm:$0xff]
      %v232 = vld [vmem:[%s220 + $0x20] sm:$0xff]
      %v233 = vld [vmem:[%s220 + $0x28] sm:$0xff]
      %v234 = vld [vmem:[%s220 + $0x30] sm:$0xff]
      %v235 = vld [vmem:[%s220 + $0x38] sm:$0xff]
      %v236 = vld [vmem:[%s220 + $0x40] sm:$0xff]
      %v237 = vld [vmem:[%s220 + $0x48] sm:$0xff]
      %v238 = vld [vmem:[%s220 + $0x50] sm:$0xff]
      %v239 = vld [vmem:[%s220 + $0x58] sm:$0xff]
      %v240 = vld [vmem:[%s220 + $0x60] sm:$0xff]
      %v241 = vld [vmem:[%s220 + $0x68] sm:$0xff]
      %v242 = vld [vmem:[%s220 + $0x70] sm:$0xff]
      %v243 = vld [vmem:[%s220 + $0x78] sm:$0xff]
      %v244 = vld [vmem:[%s3] sm:$0x1]
      %v246 = vlaneseq
      %v247 = vshrl.u32 %v246, 7
      %v248 = vsub.s32 0, %v247
      %v249 = vrot.slane %v244, %v248
      %v251 = vmul.f32 %v228, %v249
      %v252 = vmul.f32 %v229, %v249
      %v253 = vmul.f32 %v230, %v249
      %v254 = vmul.f32 %v231, %v249
      %v255 = vmul.f32 %v232, %v249
      %v256 = vmul.f32 %v233, %v249
      %v257 = vmul.f32 %v234, %v249
      %v258 = vmul.f32 %v235, %v249
      %v259 = vmul.f32 %v236, %v249
      %v260 = vmul.f32 %v237, %v249
      %v261 = vmul.f32 %v238, %v249
      %v262 = vmul.f32 %v239, %v249
      %v263 = vmul.f32 %v240, %v249
      %v264 = vmul.f32 %v241, %v249
      %v265 = vmul.f32 %v242, %v249
      %v266 = vmul.f32 %v243, %v249
      %v267 = vld [vmem:[%s4] sm:$0x1]
      %v269 = vlaneseq
      %v270 = vshrl.u32 %v269, 7
      %v271 = vsub.s32 0, %v270
      %v272 = vrot.slane %v267, %v271
      %v274 = vadd.f32 %v251, %v272
      %v275 = vadd.f32 %v252, %v272
      %v276 = vadd.f32 %v253, %v272
      %v277 = vadd.f32 %v254, %v272
      %v278 = vadd.f32 %v255, %v272
      %v279 = vadd.f32 %v256, %v272
      %v280 = vadd.f32 %v257, %v272
      %v281 = vadd.f32 %v258, %v272
      %v282 = vadd.f32 %v259, %v272
      %v283 = vadd.f32 %v260, %v272
      %v284 = vadd.f32 %v261, %v272
      %v285 = vadd.f32 %v262, %v272
      %v286 = vadd.f32 %v263, %v272
      %v287 = vadd.f32 %v264, %v272
      %v288 = vadd.f32 %v265, %v272
      %v289 = vadd.f32 %v266, %v272
      %v290 = vmax.f32 %v274, 0.0
      %v291 = vmax.f32 %v275, 0.0
      %v292 = vmax.f32 %v276, 0.0
      %v293 = vmax.f32 %v277, 0.0
      %v294 = vmax.f32 %v278, 0.0
      %v295 = vmax.f32 %v279, 0.0
      %v296 = vmax.f32 %v280, 0.0
      %v297 = vmax.f32 %v281, 0.0
      %v298 = vmax.f32 %v282, 0.0
      %v299 = vmax.f32 %v283, 0.0
      %v300 = vmax.f32 %v284, 0.0
      %v301 = vmax.f32 %v285, 0.0
      %v302 = vmax.f32 %v286, 0.0
      %v303 = vmax.f32 %v287, 0.0
      %v304 = vmax.f32 %v288, 0.0
      %v305 = vmax.f32 %v289, 0.0
      %v306 = vld [vmem:[%s1] sm:$0xff]
      %v307 = vld [vmem:[%s1 + $0x8] sm:$0xff]
      %v308 = vld [vmem:[%s1 + $0x10] sm:$0xff]
      %v309 = vld [vmem:[%s1 + $0x18] sm:$0xff]
      %v310 = vld [vmem:[%s1 + $0x20] sm:$0xff]
      %v311 = vld [vmem:[%s1 + $0x28] sm:$0xff]
      %v312 = vld [vmem:[%s1 + $0x30] sm:$0xff]
      %v313 = vld [vmem:[%s1 + $0x38] sm:$0xff]
      %v314 = vld [vmem:[%s1 + $0x40] sm:$0xff]
      %v315 = vld [vmem:[%s1 + $0x48] sm:$0xff]
      %v316 = vld [vmem:[%s1 + $0x50] sm:$0xff]
      %v317 = vld [vmem:[%s1 + $0x58] sm:$0xff]
      %v318 = vld [vmem:[%s1 + $0x60] sm:$0xff]
      %v319 = vld [vmem:[%s1 + $0x68] sm:$0xff]
      %v320 = vld [vmem:[%s1 + $0x70] sm:$0xff]
      %v321 = vld [vmem:[%s1 + $0x78] sm:$0xff]
      %v322 = vld [vmem:[%s2] sm:$0x1]
      %v324 = vlaneseq
      %v325 = vshrl.u32 %v324, 7
      %v326 = vsub.s32 0, %v325
      %v327 = vrot.slane %v322, %v326
      %329 = vmatprep.subr.mxu0 0.0
      %330 = vmatpush1.msra.mxu0 %v306
      %331 = vmatprep.subr.mxu0 0.0
      %332 = vmatpush1.msra.mxu0 %v307
      %333 = vmatprep.subr.mxu0 0.0
      %334 = vmatpush1.msra.mxu0 %v308
      %335 = vmatprep.subr.mxu0 0.0
      %336 = vmatpush1.msra.mxu0 %v309
      %337 = vmatprep.subr.mxu0 0.0
      %338 = vmatpush1.msra.mxu0 %v310
      %339 = vmatprep.subr.mxu0 0.0
      %340 = vmatpush1.msra.mxu0 %v311
      %341 = vmatprep.subr.mxu0 0.0
      %342 = vmatpush1.msra.mxu0 %v312
      %343 = vmatprep.subr.mxu0 0.0
      %344 = vmatpush1.msra.mxu0 %v313
      %345 = vmatprep.subr.mxu0 0.0
      %346 = vmatpush1.msra.mxu0 %v314
      %347 = vmatprep.subr.mxu0 0.0
      %348 = vmatpush1.msra.mxu0 %v315
      %349 = vmatprep.subr.mxu0 0.0
      %350 = vmatpush1.msra.mxu0 %v316
      %351 = vmatprep.subr.mxu0 0.0
      %352 = vmatpush1.msra.mxu0 %v317
      %353 = vmatprep.subr.mxu0 0.0
      %354 = vmatpush1.msra.mxu0 %v318
      %355 = vmatprep.subr.mxu0 0.0
      %356 = vmatpush1.msra.mxu0 %v319
      %357 = vmatprep.subr.mxu0 0.0
      %358 = vmatpush1.msra.mxu0 %v320
      %359 = vmatprep.subr.mxu0 0.0
      %360 = vmatpush1.msra.mxu0 %v321
      %361 = vmatprep.subr.mxu0 0.0
      %362 = vmatpush1.msra.mxu0 0.0
      %363 = vmatprep.subr.mxu0 0.0
      %364 = vmatpush1.msra.mxu0 0.0
      %365 = vmatprep.subr.mxu0 0.0
      %366 = vmatpush1.msra.mxu0 0.0
      %367 = vmatprep.subr.mxu0 0.0
      %368 = vmatpush1.msra.mxu0 0.0
      %369 = vmatprep.subr.mxu0 0.0
      %370 = vmatpush1.msra.mxu0 0.0
      %371 = vmatprep.subr.mxu0 0.0
      %372 = vmatpush1.msra.mxu0 0.0
      %373 = vmatprep.subr.mxu0 0.0
      %374 = vmatpush1.msra.mxu0 0.0
      %375 = vmatprep.subr.mxu0 0.0
      %376 = vmatpush1.msra.mxu0 0.0
      %377 = vmatprep.subr.mxu0 0.0
      %378 = vmatpush1.msra.mxu0 0.0
      %379 = vmatprep.subr.mxu0 0.0
      %380 = vmatpush1.msra.mxu0 0.0
      %381 = vmatprep.subr.mxu0 0.0
      %382 = vmatpush1.msra.mxu0 0.0
      %383 = vmatprep.subr.mxu0 0.0
      %384 = vmatpush1.msra.mxu0 0.0
      %385 = vmatprep.subr.mxu0 0.0
      %386 = vmatpush1.msra.mxu0 0.0
      %387 = vmatprep.subr.mxu0 0.0
      %388 = vmatpush1.msra.mxu0 0.0
      %389 = vmatprep.subr.mxu0 0.0
      %390 = vmatpush1.msra.mxu0 0.0
      %391 = vmatprep.subr.mxu0 0.0
      %392 = vmatpush1.msra.mxu0 0.0
      %393 = vmatprep.mubr.f32.mxu0 0.0
      %394 = vmatmul.mubr.f32.gmra.mrb[0].mxu0 %v290
      %v395 = vpop.f32.mrb[0].mxu0
      %v396 = vadd.f32 %v327, %v395
      %v397 = vpop.f32.mrb[0].mxu0
      %398 = vmatprep.mubr.f32.mxu0 0.0
      %399 = vmatmul.mubr.f32.gmra.mrb[0].mxu0 %v291
      %v400 = vpop.f32.mrb[0].mxu0
      %v401 = vadd.f32 %v327, %v400
      %v402 = vpop.f32.mrb[0].mxu0
      %403 = vmatprep.mubr.f32.mxu0 0.0
      %404 = vmatmul.mubr.f32.gmra.mrb[0].mxu0 %v292
      %v405 = vpop.f32.mrb[0].mxu0
      %v406 = vadd.f32 %v327, %v405
      %v407 = vpop.f32.mrb[0].mxu0
      %408 = vmatprep.mubr.f32.mxu0 0.0
      %409 = vmatmul.mubr.f32.gmra.mrb[0].mxu0 %v293
      %v410 = vpop.f32.mrb[0].mxu0
      %v411 = vadd.f32 %v327, %v410
      %v412 = vpop.f32.mrb[0].mxu0
      %413 = vmatprep.mubr.f32.mxu0 0.0
      %414 = vmatmul.mubr.f32.gmra.mrb[0].mxu0 %v294
      %v415 = vpop.f32.mrb[0].mxu0
      %v416 = vadd.f32 %v327, %v415
      %v417 = vpop.f32.mrb[0].mxu0
      %418 = vmatprep.mubr.f32.mxu0 0.0
      %419 = vmatmul.mubr.f32.gmra.mrb[0].mxu0 %v295
      %v420 = vpop.f32.mrb[0].mxu0
      %v421 = vadd.f32 %v327, %v420
      %v422 = vpop.f32.mrb[0].mxu0
      %423 = vmatprep.mubr.f32.mxu0 0.0
      %424 = vmatmul.mubr.f32.gmra.mrb[0].mxu0 %v296
      %v425 = vpop.f32.mrb[0].mxu0
      %v426 = vadd.f32 %v327, %v425
      %v427 = vpop.f32.mrb[0].mxu0
      %428 = vmatprep.mubr.f32.mxu0 0.0
      %429 = vmatmul.mubr.f32.gmra.mrb[0].mxu0 %v297
      %v430 = vpop.f32.mrb[0].mxu0
      %v431 = vadd.f32 %v327, %v430
      %v432 = vpop.f32.mrb[0].mxu0
      %433 = vmatprep.mubr.f32.mxu0 0.0
      %434 = vmatmul.mubr.f32.gmra.mrb[0].mxu0 %v298
      %v435 = vpop.f32.mrb[0].mxu0
      %v436 = vadd.f32 %v327, %v435
      %v437 = vpop.f32.mrb[0].mxu0
      %438 = vmatprep.mubr.f32.mxu0 0.0
      %439 = vmatmul.mubr.f32.gmra.mrb[0].mxu0 %v299
      %v440 = vpop.f32.mrb[0].mxu0
      %v441 = vadd.f32 %v327, %v440
      %v442 = vpop.f32.mrb[0].mxu0
      %443 = vmatprep.mubr.f32.mxu0 0.0
      %444 = vmatmul.mubr.f32.gmra.mrb[0].mxu0 %v300
      %v445 = vpop.f32.mrb[0].mxu0
      %v446 = vadd.f32 %v327, %v445
      %v447 = vpop.f32.mrb[0].mxu0
      %448 = vmatprep.mubr.f32.mxu0 0.0
      %449 = vmatmul.mubr.f32.gmra.mrb[0].mxu0 %v301
      %v450 = vpop.f32.mrb[0].mxu0
      %v451 = vadd.f32 %v327, %v450
      %v452 = vpop.f32.mrb[0].mxu0
      %453 = vmatprep.mubr.f32.mxu0 0.0
      %454 = vmatmul.mubr.f32.gmra.mrb[0].mxu0 %v302
      %v455 = vpop.f32.mrb[0].mxu0
      %v456 = vadd.f32 %v327, %v455
      %v457 = vpop.f32.mrb[0].mxu0
      %458 = vmatprep.mubr.f32.mxu0 0.0
      %459 = vmatmul.mubr.f32.gmra.mrb[0].mxu0 %v303
      %v460 = vpop.f32.mrb[0].mxu0
      %v461 = vadd.f32 %v327, %v460
      %v462 = vpop.f32.mrb[0].mxu0
      %463 = vmatprep.mubr.f32.mxu0 0.0
      %464 = vmatmul.mubr.f32.gmra.mrb[0].mxu0 %v304
      %v465 = vpop.f32.mrb[0].mxu0
      %v466 = vadd.f32 %v327, %v465
      %v467 = vpop.f32.mrb[0].mxu0
      %468 = vmatprep.mubr.f32.mxu0 0.0
      %469 = vmatmul.mubr.f32.gmra.mrb[0].mxu0 %v305
      %v470 = vpop.f32.mrb[0].mxu0
      %v471 = vadd.f32 %v327, %v470
      %v472 = vpop.f32.mrb[0].mxu0
      %473 = vdwg.mxu0
      %v474 = vpack.c.bf16 %v401, %v396
      %v475 = vpack.c.bf16 %v411, %v406
      %v476 = vpack.c.bf16 %v421, %v416
      %v477 = vpack.c.bf16 %v431, %v426
      %v478 = vpack.c.bf16 %v441, %v436
      %v479 = vpack.c.bf16 %v451, %v446
      %v480 = vpack.c.bf16 %v461, %v456
      %v481 = vpack.c.bf16 %v471, %v466
      %v490 = vunpack.c.l.b16 %v474
      %v491 = vunpack.c.h.b16 %v474
      %v492 = vunpack.c.l.b16 %v475
      %v493 = vunpack.c.h.b16 %v475
      %v494 = vunpack.c.l.b16 %v476
      %v495 = vunpack.c.h.b16 %v476
      %v496 = vunpack.c.l.b16 %v477
      %v497 = vunpack.c.h.b16 %v477
      %v498 = vunpack.c.l.b16 %v478
      %v499 = vunpack.c.h.b16 %v478
      %v500 = vunpack.c.l.b16 %v479
      %v501 = vunpack.c.h.b16 %v479
      %v502 = vunpack.c.l.b16 %v480
      %v503 = vunpack.c.h.b16 %v480
      %v504 = vunpack.c.l.b16 %v481
      %v505 = vunpack.c.h.b16 %v481
      %v506 = vpack.c.b16 %v490, %v490
      %v507 = vpack.c.b16 %v491, %v491
      %v508 = vpack.c.b16 %v492, %v492
      %v509 = vpack.c.b16 %v493, %v493
      %v510 = vpack.c.b16 %v494, %v494
      %v511 = vpack.c.b16 %v495, %v495
      %v512 = vpack.c.b16 %v496, %v496
      %v513 = vpack.c.b16 %v497, %v497
      %v514 = vpack.c.b16 %v498, %v498
      %v515 = vpack.c.b16 %v499, %v499
      %v516 = vpack.c.b16 %v500, %v500
      %v517 = vpack.c.b16 %v501, %v501
      %v518 = vpack.c.b16 %v502, %v502
      %v519 = vpack.c.b16 %v503, %v503
      %v520 = vpack.c.b16 %v504, %v504
      %v521 = vpack.c.b16 %v505, %v505
      %538 = vst [vmem:[%s226] sm:$0xf] %v506
      %539 = vst [vmem:[%s226 + $0x4] sm:$0xf] %v507
      %540 = vst [vmem:[%s226 + $0x8] sm:$0xf] %v508
      %541 = vst [vmem:[%s226 + $0xc] sm:$0xf] %v509
      %542 = vst [vmem:[%s226 + $0x10] sm:$0xf] %v510
      %543 = vst [vmem:[%s226 + $0x14] sm:$0xf] %v511
      %544 = vst [vmem:[%s226 + $0x18] sm:$0xf] %v512
      %545 = vst [vmem:[%s226 + $0x1c] sm:$0xf] %v513
      %546 = vst [vmem:[%s226 + $0x20] sm:$0xf] %v514
      %547 = vst [vmem:[%s226 + $0x24] sm:$0xf] %v515
      %548 = vst [vmem:[%s226 + $0x28] sm:$0xf] %v516
      %549 = vst [vmem:[%s226 + $0x2c] sm:$0xf] %v517
      %550 = vst [vmem:[%s226 + $0x30] sm:$0xf] %v518
      %551 = vst [vmem:[%s226 + $0x34] sm:$0xf] %v519
      %552 = vst [vmem:[%s226 + $0x38] sm:$0xf] %v520
      %553 = vst [vmem:[%s226 + $0x3c] sm:$0xf] %v521
      %s554 = smul.u32 16, %s16
      %p555 = scmp.lt.s32.totalorder %s554, 31
      %s556 = scalar_select %p555, %s554, 31
      %s557 = smul.addr %s556, 4
      %s558 = scalar_lea.vmem %s5, %s557
      // Predicated region
      $region41: #{_lambda_.7} parent=39 // pred_check
        %p559 = pneg %p144
      $region42: #{_lambda_.7} parent=39 // pred_check_branch
        %561 = sbr.rel (%p559) target = $region44
      $region43: #{_lambda_.7} parent=39 // pred_region
        %s562 = smul.u32 16, %s16
      $region44: #{_lambda_.7} parent=39 // pred_fallthru
        _
    $region40: #{_lambda_.7} parent=5 // pred_fallthru
      _
    %p563 = scmp.le.s32.totalorder 2, %s11
    // Predicated region
    $region45: #{_lambda_.7} parent=5 // pred_check
      %p564 = pneg %p563
    $region46: #{_lambda_.7} parent=5 // pred_check_branch
      %566 = sbr.rel (%p564) target = $region48
    $region47: #{_lambda_.7} parent=5 // pred_region
      %s567 = ssub.s32 %s11, 2
      // Predicated region
      $region49: #{_lambda_.7} parent=47 // pred_check
        %p568 = pneg %p150
      $region50: #{_lambda_.7} parent=47 // pred_check_branch
        %570 = sbr.rel (%p568) target = $region52
      $region51: #{_lambda_.7} parent=47 // pred_region
        %s571 = smul.u32 16, %s17
        %p572 = scmp.lt.s32.totalorder %s571, 31
        %s573 = scalar_select %p572, %s571, 31
        %s574 = smul.addr %s573, 4
        %s575 = scalar_lea.vmem %s5, %s574
      $region52: #{_lambda_.7} parent=47 // pred_fallthru
        _
    $region48: #{_lambda_.7} parent=5 // pred_fallthru
      _
  $region6: #{_lambda_.7} parent=0 // loop_footer
    %s15 = sadd.s32 1, %s11
  $region7: #{_lambda_.7} parent=0 // loop_footer_branch
    %10 = sbr.rel target = $region3
  $region8: #{_lambda_.7} parent=0 // loop_exit
    _

// kernel: _lambda_.5
$region0: #{_lambda_.5}
  #allocation0 [shape = 'u32[]', space=smem, size = 0x4, offset = 0x4, fixed_abs, tag = 'smem constant byte address 0x4 - core index']
  #allocation1 [shape = 'u32[144,128]{1,0:T(1,128)}', space=vmem, size = 0x12000, scoped, tag = 'internal scratch']
  %s0 = inlined_call_operand.vmem [shape: f32[256,128], index: 0, kind: input, shape index: {}]
  %s1 = inlined_call_operand.vmem [shape: f32[128,128], index: 1, kind: input, shape index: {}]
  %s2 = inlined_call_operand.vmem [shape: f32[1,128], index: 2, kind: input, shape index: {}]
  %s3 = inlined_call_operand.vmem [shape: bf16[256,128], index: 3, kind: output, shape index: {}]
  %s4 = sld [smem:[#allocation0]]
  $region45: #{_lambda_.5} parent=0
    _
  %s6 = ssub.s32 1, %s4
  %s7 = scalar_select 0, %s6, %s4
  loop: start=0, step=1, limit=4
  $region2: #{_lambda_.5} parent=0 // loop_pre_header
    _
  $region3: #{_lambda_.5} parent=0 // loop_header
    %s9 = sphi 0, %s13
    %p10 = scmp.ge.s32.totalorder %s9, 4
    %s19 = sphi 0, %s21
    %s22 = sphi 0, %s19
    %s23 = sphi 0, %s22
    %s39 = sphi 0, %s23
    %s43 = sphi 0, %s43
    %s45 = sphi 0, %s43
    %s46 = sphi 0, %s45
    %s60 = sphi 0, %s46
    %s64 = sphi 0, %s64
    %s66 = sphi 0, %s64
    %s67 = sphi 0, %s66
    %s81 = sphi 0, %s67
    %s87 = sphi 0, %s89
    %s90 = sphi 0, %s87
    %s91 = sphi 0, %s90
    %s107 = sphi 0, %s91
  $region4: #{_lambda_.5} parent=0 // loop_header_branch
    %12 = sbr.rel (%p10) target = $region8
  $region5: #{_lambda_.5} parent=0 // loop_body
    %s14 = ssub.s32 %s9, 1
    %s15 = ssub.s32 %s9, 2
    %s16 = sadd.s32 %s9, 1
    %s17 = ssub.s32 %s9, %s16
    %p18 = scmp.eq.s32.totalorder %s17, 0
    %s20 = sadd.s32 %s19, 1
    %s21 = scalar_select %p18, %s19, %s20
    %p24 = pneg %p18
    %p25 = scmp.eq.s32.totalorder %s9, 1
    %p26 = por %p24, %p25
    %p27 = scmp.ne.s32.totalorder %s19, %s22
    %p28 = scmp.eq.s32.totalorder %s9, 0
    %p29 = por %p27, %p28
    %p30 = scmp.ne.s32.totalorder %s19, %s22
    %p31 = scmp.eq.s32.totalorder %s14, 1
    %p32 = por %p30, %p31
    %p33 = scmp.ne.s32.totalorder %s22, %s23
    %p34 = scmp.eq.s32.totalorder %s14, 0
    %p35 = por %p33, %p34
    %p36 = scmp.ne.s32.totalorder %s22, %s23
    %p37 = scmp.eq.s32.totalorder %s15, 1
    %p38 = por %p36, %p37
    %p40 = scmp.ne.s32.totalorder %s23, %s39
    %p41 = scmp.eq.s32.totalorder %s15, 0
    %p42 = por %p40, %p41
    %s44 = sadd.s32 %s43, 1
    %p47 = scmp.eq.s32.totalorder %s9, 1
    %p48 = scmp.ne.s32.totalorder %s43, %s45
    %p49 = scmp.eq.s32.totalorder %s9, 0
    %p50 = por %p48, %p49
    %p51 = scmp.ne.s32.totalorder %s43, %s45
    %p52 = scmp.eq.s32.totalorder %s14, 1
    %p53 = por %p51, %p52
    %p54 = scmp.ne.s32.totalorder %s45, %s46
    %p55 = scmp.eq.s32.totalorder %s14, 0
    %p56 = por %p54, %p55
    %p57 = scmp.ne.s32.totalorder %s45, %s46
    %p58 = scmp.eq.s32.totalorder %s15, 1
    %p59 = por %p57, %p58
    %p61 = scmp.ne.s32.totalorder %s46, %s60
    %p62 = scmp.eq.s32.totalorder %s15, 0
    %p63 = por %p61, %p62
    %s65 = sadd.s32 %s64, 1
    %p68 = scmp.eq.s32.totalorder %s9, 1
    %p69 = scmp.ne.s32.totalorder %s64, %s66
    %p70 = scmp.eq.s32.totalorder %s9, 0
    %p71 = por %p69, %p70
    %p72 = scmp.ne.s32.totalorder %s64, %s66
    %p73 = scmp.eq.s32.totalorder %s14, 1
    %p74 = por %p72, %p73
    %p75 = scmp.ne.s32.totalorder %s66, %s67
    %p76 = scmp.eq.s32.totalorder %s14, 0
    %p77 = por %p75, %p76
    %p78 = scmp.ne.s32.totalorder %s66, %s67
    %p79 = scmp.eq.s32.totalorder %s15, 1
    %p80 = por %p78, %p79
    %p82 = scmp.ne.s32.totalorder %s67, %s81
    %p83 = scmp.eq.s32.totalorder %s15, 0
    %p84 = por %p82, %p83
    %s85 = ssub.s32 %s9, %s16
    %p86 = scmp.eq.s32.totalorder %s85, 0
    %s88 = sadd.s32 %s87, 1
    %s89 = scalar_select %p86, %s87, %s88
    %p92 = pneg %p86
    %p93 = scmp.eq.s32.totalorder %s9, 1
    %p94 = por %p92, %p93
    %p95 = scmp.ne.s32.totalorder %s87, %s90
    %p96 = scmp.eq.s32.totalorder %s9, 0
    %p97 = por %p95, %p96
    %p98 = scmp.ne.s32.totalorder %s87, %s90
    %p99 = scmp.eq.s32.totalorder %s14, 1
    %p100 = por %p98, %p99
    %p101 = scmp.ne.s32.totalorder %s90, %s91
    %p102 = scmp.eq.s32.totalorder %s14, 0
    %p103 = por %p101, %p102
    %p104 = scmp.ne.s32.totalorder %s90, %s91
    %p105 = scmp.eq.s32.totalorder %s15, 1
    %p106 = por %p104, %p105
    %p108 = scmp.ne.s32.totalorder %s91, %s107
    %p109 = scmp.eq.s32.totalorder %s15, 0
    %p110 = por %p108, %p109
    %p111 = scmp.le.s32.totalorder 1, %s9
    %p112 = scmp.lt.s32.totalorder %s9, 3
    %p113 = pnand %p111, %p112
    %p114 = pneg %p113
    // Predicated region
    $region9: #{_lambda_.5} parent=5 // pred_check
      _
    $region10: #{_lambda_.5} parent=5 // pred_check_branch
      %116 = sbr.rel (%p113) target = $region12
    $region11: #{_lambda_.5} parent=5 // pred_region
      %s117 = ssub.s32 %s9, 1
      // Predicated region
      $region13: #{_lambda_.5} parent=11 // pred_check
        %p118 = pneg %p56
      $region14: #{_lambda_.5} parent=11 // pred_check_branch
        %120 = sbr.rel (%p118) target = $region16
      $region15: #{_lambda_.5} parent=11 // pred_region
        _
      $region16: #{_lambda_.5} parent=11 // pred_fallthru
        _
      // Predicated region
      $region17: #{_lambda_.5} parent=11 // pred_check
        %p121 = pneg %p77
      $region18: #{_lambda_.5} parent=11 // pred_check_branch
        %123 = sbr.rel (%p121) target = $region20
      $region19: #{_lambda_.5} parent=11 // pred_region
        _
      $region20: #{_lambda_.5} parent=11 // pred_fallthru
        _
    $region12: #{_lambda_.5} parent=5 // pred_fallthru
      _
    %p124 = scmp.lt.s32.totalorder %s9, 2
    // Predicated region
    $region21: #{_lambda_.5} parent=5 // pred_check
      %p125 = pneg %p124
    $region22: #{_lambda_.5} parent=5 // pred_check_branch
      %127 = sbr.rel (%p125) target = $region24
    $region23: #{_lambda_.5} parent=5 // pred_region
      // Predicated region
      $region25: #{_lambda_.5} parent=23 // pred_check
        %p128 = pneg %p29
      $region26: #{_lambda_.5} parent=23 // pred_check_branch
        %130 = sbr.rel (%p128) target = $region28
      $region27: #{_lambda_.5} parent=23 // pred_region
        %s131 = smul.u32 16, %s9
        %p132 = scmp.lt.s32.totalorder %s131, 31
        %s133 = scalar_select %p132, %s131, 31
        %s134 = smul.addr %s133, 8
        %s135 = scalar_lea.vmem %s0, %s134
        %s136 = smul.u32 16, %s9
      $region28: #{_lambda_.5} parent=23 // pred_fallthru
        _
    $region24: #{_lambda_.5} parent=5 // pred_fallthru
      _
    %p137 = scmp.le.s32.totalorder 1, %s9
    %p138 = scmp.lt.s32.totalorder %s9, 3
    %p139 = pnand %p137, %p138
    %p140 = pneg %p139
    // Predicated region
    $region29: #{_lambda_.5} parent=5 // pred_check
      _
    $region30: #{_lambda_.5} parent=5 // pred_check_branch
      %142 = sbr.rel (%p139) target = $region32
    $region31: #{_lambda_.5} parent=5 // pred_region
      %s143 = ssub.s32 %s9, 1
      %s144 = smul.u32 16, %s14
      %p145 = scmp.lt.s32.totalorder %s144, 31
      %s146 = scalar_select %p145, %s144, 31
      %s147 = smul.addr %s146, 8
      %s148 = scalar_lea.vmem %s0, %s147
      %p149 = pneg %p35
      %p150 = pneg %p32
      %p151 = pneg %p56
      %p152 = pneg %p53
      %p153 = pneg %p77
      %p154 = pneg %p74
      %p155 = pneg %p103
      %p156 = pneg %p100
      %s157 = smul.u32 16, %s14
      %p158 = scmp.lt.s32.totalorder %s157, 31
      %s159 = scalar_select %p158, %s157, 31
      %s160 = smul.addr %s159, 4
      %s161 = scalar_lea.vmem %s3, %s160
      %s162 = smul.u32 16, %s14
      %p163 = scmp.lt.s32.totalorder %s162, 31
      %s164 = scalar_select %p163, %s162, 31
      %s165 = smul.addr %s164, 8
      %s166 = scalar_lea.vmem %s0, %s165
      %s167 = smul.u32 16, %s14
      %s168 = smul.u32 16, %s14
      %p169 = scmp.lt.s32.totalorder %s168, 31
      %s170 = scalar_select %p169, %s168, 31
      %s171 = smul.addr %s170, 4
      %s172 = scalar_lea.vmem %s3, %s171
      %s173 = smul.u32 16, %s14
      %v174 = vld [vmem:[%s166] sm:$0xff]
      %v175 = vld [vmem:[%s166 + $0x8] sm:$0xff]
      %v176 = vld [vmem:[%s166 + $0x10] sm:$0xff]
      %v177 = vld [vmem:[%s166 + $0x18] sm:$0xff]
      %v178 = vld [vmem:[%s166 + $0x20] sm:$0xff]
      %v179 = vld [vmem:[%s166 + $0x28] sm:$0xff]
      %v180 = vld [vmem:[%s166 + $0x30] sm:$0xff]
      %v181 = vld [vmem:[%s166 + $0x38] sm:$0xff]
      %v182 = vld [vmem:[%s166 + $0x40] sm:$0xff]
      %v183 = vld [vmem:[%s166 + $0x48] sm:$0xff]
      %v184 = vld [vmem:[%s166 + $0x50] sm:$0xff]
      %v185 = vld [vmem:[%s166 + $0x58] sm:$0xff]
      %v186 = vld [vmem:[%s166 + $0x60] sm:$0xff]
      %v187 = vld [vmem:[%s166 + $0x68] sm:$0xff]
      %v188 = vld [vmem:[%s166 + $0x70] sm:$0xff]
      %v189 = vld [vmem:[%s166 + $0x78] sm:$0xff]
      %v190 = vld [vmem:[%s1] sm:$0xff]
      %v191 = vld [vmem:[%s1 + $0x8] sm:$0xff]
      %v192 = vld [vmem:[%s1 + $0x10] sm:$0xff]
      %v193 = vld [vmem:[%s1 + $0x18] sm:$0xff]
      %v194 = vld [vmem:[%s1 + $0x20] sm:$0xff]
      %v195 = vld [vmem:[%s1 + $0x28] sm:$0xff]
      %v196 = vld [vmem:[%s1 + $0x30] sm:$0xff]
      %v197 = vld [vmem:[%s1 + $0x38] sm:$0xff]
      %v198 = vld [vmem:[%s1 + $0x40] sm:$0xff]
      %v199 = vld [vmem:[%s1 + $0x48] sm:$0xff]
      %v200 = vld [vmem:[%s1 + $0x50] sm:$0xff]
      %v201 = vld [vmem:[%s1 + $0x58] sm:$0xff]
      %v202 = vld [vmem:[%s1 + $0x60] sm:$0xff]
      %v203 = vld [vmem:[%s1 + $0x68] sm:$0xff]
      %v204 = vld [vmem:[%s1 + $0x70] sm:$0xff]
      %v205 = vld [vmem:[%s1 + $0x78] sm:$0xff]
      %v206 = vld [vmem:[%s2] sm:$0x1]
      %v208 = vlaneseq
      %v209 = vshrl.u32 %v208, 7
      %v210 = vsub.s32 0, %v209
      %v211 = vrot.slane %v206, %v210
      %213 = vmatprep.subr.mxu0 0.0
      %214 = vmatpush1.msra.mxu0 %v190
      %215 = vmatprep.subr.mxu0 0.0
      %216 = vmatpush1.msra.mxu0 %v191
      %217 = vmatprep.subr.mxu0 0.0
      %218 = vmatpush1.msra.mxu0 %v192
      %219 = vmatprep.subr.mxu0 0.0
      %220 = vmatpush1.msra.mxu0 %v193
      %221 = vmatprep.subr.mxu0 0.0
      %222 = vmatpush1.msra.mxu0 %v194
      %223 = vmatprep.subr.mxu0 0.0
      %224 = vmatpush1.msra.mxu0 %v195
      %225 = vmatprep.subr.mxu0 0.0
      %226 = vmatpush1.msra.mxu0 %v196
      %227 = vmatprep.subr.mxu0 0.0
      %228 = vmatpush1.msra.mxu0 %v197
      %229 = vmatprep.subr.mxu0 0.0
      %230 = vmatpush1.msra.mxu0 %v198
      %231 = vmatprep.subr.mxu0 0.0
      %232 = vmatpush1.msra.mxu0 %v199
      %233 = vmatprep.subr.mxu0 0.0
      %234 = vmatpush1.msra.mxu0 %v200
      %235 = vmatprep.subr.mxu0 0.0
      %236 = vmatpush1.msra.mxu0 %v201
      %237 = vmatprep.subr.mxu0 0.0
      %238 = vmatpush1.msra.mxu0 %v202
      %239 = vmatprep.subr.mxu0 0.0
      %240 = vmatpush1.msra.mxu0 %v203
      %241 = vmatprep.subr.mxu0 0.0
      %242 = vmatpush1.msra.mxu0 %v204
      %243 = vmatprep.subr.mxu0 0.0
      %244 = vmatpush1.msra.mxu0 %v205
      %245 = vmatprep.subr.mxu0 0.0
      %246 = vmatpush1.msra.mxu0 0.0
      %247 = vmatprep.subr.mxu0 0.0
      %248 = vmatpush1.msra.mxu0 0.0
      %249 = vmatprep.subr.mxu0 0.0
      %250 = vmatpush1.msra.mxu0 0.0
      %251 = vmatprep.subr.mxu0 0.0
      %252 = vmatpush1.msra.mxu0 0.0
      %253 = vmatprep.subr.mxu0 0.0
      %254 = vmatpush1.msra.mxu0 0.0
      %255 = vmatprep.subr.mxu0 0.0
      %256 = vmatpush1.msra.mxu0 0.0
      %257 = vmatprep.subr.mxu0 0.0
      %258 = vmatpush1.msra.mxu0 0.0
      %259 = vmatprep.subr.mxu0 0.0
      %260 = vmatpush1.msra.mxu0 0.0
      %261 = vmatprep.subr.mxu0 0.0
      %262 = vmatpush1.msra.mxu0 0.0
      %263 = vmatprep.subr.mxu0 0.0
      %264 = vmatpush1.msra.mxu0 0.0
      %265 = vmatprep.subr.mxu0 0.0
      %266 = vmatpush1.msra.mxu0 0.0
      %267 = vmatprep.subr.mxu0 0.0
      %268 = vmatpush1.msra.mxu0 0.0
      %269 = vmatprep.subr.mxu0 0.0
      %270 = vmatpush1.msra.mxu0 0.0
      %271 = vmatprep.subr.mxu0 0.0
      %272 = vmatpush1.msra.mxu0 0.0
      %273 = vmatprep.subr.mxu0 0.0
      %274 = vmatpush1.msra.mxu0 0.0
      %275 = vmatprep.subr.mxu0 0.0
      %276 = vmatpush1.msra.mxu0 0.0
      %277 = vmatprep.mubr.f32.mxu0 0.0
      %278 = vmatmul.mubr.f32.gmra.mrb[0].mxu0 %v174
      %v279 = vpop.f32.mrb[0].mxu0
      %v280 = vadd.f32 %v211, %v279
      %v281 = vpop.f32.mrb[0].mxu0
      %282 = vmatprep.mubr.f32.mxu0 0.0
      %283 = vmatmul.mubr.f32.gmra.mrb[0].mxu0 %v175
      %v284 = vpop.f32.mrb[0].mxu0
      %v285 = vadd.f32 %v211, %v284
      %v286 = vpop.f32.mrb[0].mxu0
      %287 = vmatprep.mubr.f32.mxu0 0.0
      %288 = vmatmul.mubr.f32.gmra.mrb[0].mxu0 %v176
      %v289 = vpop.f32.mrb[0].mxu0
      %v290 = vadd.f32 %v211, %v289
      %v291 = vpop.f32.mrb[0].mxu0
      %292 = vmatprep.mubr.f32.mxu0 0.0
      %293 = vmatmul.mubr.f32.gmra.mrb[0].mxu0 %v177
      %v294 = vpop.f32.mrb[0].mxu0
      %v295 = vadd.f32 %v211, %v294
      %v296 = vpop.f32.mrb[0].mxu0
      %297 = vmatprep.mubr.f32.mxu0 0.0
      %298 = vmatmul.mubr.f32.gmra.mrb[0].mxu0 %v178
      %v299 = vpop.f32.mrb[0].mxu0
      %v300 = vadd.f32 %v211, %v299
      %v301 = vpop.f32.mrb[0].mxu0
      %302 = vmatprep.mubr.f32.mxu0 0.0
      %303 = vmatmul.mubr.f32.gmra.mrb[0].mxu0 %v179
      %v304 = vpop.f32.mrb[0].mxu0
      %v305 = vadd.f32 %v211, %v304
      %v306 = vpop.f32.mrb[0].mxu0
      %307 = vmatprep.mubr.f32.mxu0 0.0
      %308 = vmatmul.mubr.f32.gmra.mrb[0].mxu0 %v180
      %v309 = vpop.f32.mrb[0].mxu0
      %v310 = vadd.f32 %v211, %v309
      %v311 = vpop.f32.mrb[0].mxu0
      %312 = vmatprep.mubr.f32.mxu0 0.0
      %313 = vmatmul.mubr.f32.gmra.mrb[0].mxu0 %v181
      %v314 = vpop.f32.mrb[0].mxu0
      %v315 = vadd.f32 %v211, %v314
      %v316 = vpop.f32.mrb[0].mxu0
      %317 = vmatprep.mubr.f32.mxu0 0.0
      %318 = vmatmul.mubr.f32.gmra.mrb[0].mxu0 %v182
      %v319 = vpop.f32.mrb[0].mxu0
      %v320 = vadd.f32 %v211, %v319
      %v321 = vpop.f32.mrb[0].mxu0
      %322 = vmatprep.mubr.f32.mxu0 0.0
      %323 = vmatmul.mubr.f32.gmra.mrb[0].mxu0 %v183
      %v324 = vpop.f32.mrb[0].mxu0
      %v325 = vadd.f32 %v211, %v324
      %v326 = vpop.f32.mrb[0].mxu0
      %327 = vmatprep.mubr.f32.mxu0 0.0
      %328 = vmatmul.mubr.f32.gmra.mrb[0].mxu0 %v184
      %v329 = vpop.f32.mrb[0].mxu0
      %v330 = vadd.f32 %v211, %v329
      %v331 = vpop.f32.mrb[0].mxu0
      %332 = vmatprep.mubr.f32.mxu0 0.0
      %333 = vmatmul.mubr.f32.gmra.mrb[0].mxu0 %v185
      %v334 = vpop.f32.mrb[0].mxu0
      %v335 = vadd.f32 %v211, %v334
      %v336 = vpop.f32.mrb[0].mxu0
      %337 = vmatprep.mubr.f32.mxu0 0.0
      %338 = vmatmul.mubr.f32.gmra.mrb[0].mxu0 %v186
      %v339 = vpop.f32.mrb[0].mxu0
      %v340 = vadd.f32 %v211, %v339
      %v341 = vpop.f32.mrb[0].mxu0
      %342 = vmatprep.mubr.f32.mxu0 0.0
      %343 = vmatmul.mubr.f32.gmra.mrb[0].mxu0 %v187
      %v344 = vpop.f32.mrb[0].mxu0
      %v345 = vadd.f32 %v211, %v344
      %v346 = vpop.f32.mrb[0].mxu0
      %347 = vmatprep.mubr.f32.mxu0 0.0
      %348 = vmatmul.mubr.f32.gmra.mrb[0].mxu0 %v188
      %v349 = vpop.f32.mrb[0].mxu0
      %v350 = vadd.f32 %v211, %v349
      %v351 = vpop.f32.mrb[0].mxu0
      %352 = vmatprep.mubr.f32.mxu0 0.0
      %353 = vmatmul.mubr.f32.gmra.mrb[0].mxu0 %v189
      %v354 = vpop.f32.mrb[0].mxu0
      %v355 = vadd.f32 %v211, %v354
      %v356 = vpop.f32.mrb[0].mxu0
      %357 = vdwg.mxu0
      %v358 = vpack.c.bf16 %v285, %v280
      %v359 = vpack.c.bf16 %v295, %v290
      %v360 = vpack.c.bf16 %v305, %v300
      %v361 = vpack.c.bf16 %v315, %v310
      %v362 = vpack.c.bf16 %v325, %v320
      %v363 = vpack.c.bf16 %v335, %v330
      %v364 = vpack.c.bf16 %v345, %v340
      %v365 = vpack.c.bf16 %v355, %v350
      %v374 = vunpack.c.l.b16 %v358
      %v375 = vunpack.c.h.b16 %v358
      %v376 = vunpack.c.l.b16 %v359
      %v377 = vunpack.c.h.b16 %v359
      %v378 = vunpack.c.l.b16 %v360
      %v379 = vunpack.c.h.b16 %v360
      %v380 = vunpack.c.l.b16 %v361
      %v381 = vunpack.c.h.b16 %v361
      %v382 = vunpack.c.l.b16 %v362
      %v383 = vunpack.c.h.b16 %v362
      %v384 = vunpack.c.l.b16 %v363
      %v385 = vunpack.c.h.b16 %v363
      %v386 = vunpack.c.l.b16 %v364
      %v387 = vunpack.c.h.b16 %v364
      %v388 = vunpack.c.l.b16 %v365
      %v389 = vunpack.c.h.b16 %v365
      %v390 = vpack.c.b16 %v374, %v374
      %v391 = vpack.c.b16 %v375, %v375
      %v392 = vpack.c.b16 %v376, %v376
      %v393 = vpack.c.b16 %v377, %v377
      %v394 = vpack.c.b16 %v378, %v378
      %v395 = vpack.c.b16 %v379, %v379
      %v396 = vpack.c.b16 %v380, %v380
      %v397 = vpack.c.b16 %v381, %v381
      %v398 = vpack.c.b16 %v382, %v382
      %v399 = vpack.c.b16 %v383, %v383
      %v400 = vpack.c.b16 %v384, %v384
      %v401 = vpack.c.b16 %v385, %v385
      %v402 = vpack.c.b16 %v386, %v386
      %v403 = vpack.c.b16 %v387, %v387
      %v404 = vpack.c.b16 %v388, %v388
      %v405 = vpack.c.b16 %v389, %v389
      %422 = vst [vmem:[%s172] sm:$0xf] %v390
      %423 = vst [vmem:[%s172 + $0x4] sm:$0xf] %v391
      %424 = vst [vmem:[%s172 + $0x8] sm:$0xf] %v392
      %425 = vst [vmem:[%s172 + $0xc] sm:$0xf] %v393
      %426 = vst [vmem:[%s172 + $0x10] sm:$0xf] %v394
      %427 = vst [vmem:[%s172 + $0x14] sm:$0xf] %v395
      %428 = vst [vmem:[%s172 + $0x18] sm:$0xf] %v396
      %429 = vst [vmem:[%s172 + $0x1c] sm:$0xf] %v397
      %430 = vst [vmem:[%s172 + $0x20] sm:$0xf] %v398
      %431 = vst [vmem:[%s172 + $0x24] sm:$0xf] %v399
      %432 = vst [vmem:[%s172 + $0x28] sm:$0xf] %v400
      %433 = vst [vmem:[%s172 + $0x2c] sm:$0xf] %v401
      %434 = vst [vmem:[%s172 + $0x30] sm:$0xf] %v402
      %435 = vst [vmem:[%s172 + $0x34] sm:$0xf] %v403
      %436 = vst [vmem:[%s172 + $0x38] sm:$0xf] %v404
      %437 = vst [vmem:[%s172 + $0x3c] sm:$0xf] %v405
      %s438 = smul.u32 16, %s14
      %p439 = scmp.lt.s32.totalorder %s438, 31
      %s440 = scalar_select %p439, %s438, 31
      %s441 = smul.addr %s440, 4
      %s442 = scalar_lea.vmem %s3, %s441
      // Predicated region
      $region33: #{_lambda_.5} parent=31 // pred_check
        %p443 = pneg %p100
      $region34: #{_lambda_.5} parent=31 // pred_check_branch
        %445 = sbr.rel (%p443) target = $region36
      $region35: #{_lambda_.5} parent=31 // pred_region
        %s446 = smul.u32 16, %s14
      $region36: #{_lambda_.5} parent=31 // pred_fallthru
        _
    $region32: #{_lambda_.5} parent=5 // pred_fallthru
      _
    %p447 = scmp.le.s32.totalorder 2, %s9
    // Predicated region
    $region37: #{_lambda_.5} parent=5 // pred_check
      %p448 = pneg %p447
    $region38: #{_lambda_.5} parent=5 // pred_check_branch
      %450 = sbr.rel (%p448) target = $region40
    $region39: #{_lambda_.5} parent=5 // pred_region
      %s451 = ssub.s32 %s9, 2
      // Predicated region
      $region41: #{_lambda_.5} parent=39 // pred_check
        %p452 = pneg %p106
      $region42: #{_lambda_.5} parent=39 // pred_check_branch
        %454 = sbr.rel (%p452) target = $region44
      $region43: #{_lambda_.5} parent=39 // pred_region
        %s455 = smul.u32 16, %s15
        %p456 = scmp.lt.s32.totalorder %s455, 31
        %s457 = scalar_select %p456, %s455, 31
        %s458 = smul.addr %s457, 4
        %s459 = scalar_lea.vmem %s3, %s458
      $region44: #{_lambda_.5} parent=39 // pred_fallthru
        _
    $region40: #{_lambda_.5} parent=5 // pred_fallthru
      _
  $region6: #{_lambda_.5} parent=0 // loop_footer
    %s13 = sadd.s32 1, %s9
  $region7: #{_lambda_.5} parent=0 // loop_footer_branch
    %8 = sbr.rel target = $region3
  $region8: #{_lambda_.5} parent=0 // loop_exit
    _

// kernel: _lambda_.6
$region0: #{_lambda_.6}
  #allocation0 [shape = 'u32[]', space=smem, size = 0x4, offset = 0x4, fixed_abs, tag = 'smem constant byte address 0x4 - core index']
  #allocation1 [shape = 'u32[144,128]{1,0:T(1,128)}', space=vmem, size = 0x12000, scoped, tag = 'internal scratch']
  %s0 = inlined_call_operand.vmem [shape: bf16[256,256], index: 0, kind: input, shape index: {}]
  %s1 = inlined_call_operand.vmem [shape: bf16[256,128], index: 1, kind: input, shape index: {}]
  %s2 = inlined_call_operand.vmem [shape: f32[256,128], index: 2, kind: output, shape index: {0}]
  %s3 = inlined_call_operand.vmem [shape: f32[16,128], index: 3, kind: output, shape index: {1}]
  %s4 = inlined_call_operand.vmem [shape: f32[16,128], index: 4, kind: output, shape index: {2}]
  %5 = xla_tuple %s2, %s3, %s4
  %s6 = sld [smem:[#allocation0]]
  $region65: #{_lambda_.6} parent=0
    _
  %s8 = ssub.s32 1, %s6
  %s9 = scalar_select 0, %s8, %s6
  loop: start=0, step=1, limit=4
  $region2: #{_lambda_.6} parent=0 // loop_pre_header
    _
  $region3: #{_lambda_.6} parent=0 // loop_header
    %s11 = sphi 0, %s15
    %p12 = scmp.ge.s32.totalorder %s11, 4
    %s18 = sphi 0, %s30
    %s19 = sphi 0, %s26
    %s20 = sphi 0, %s18
    %s21 = sphi 0, %s19
    %s22 = sphi 0, %s20
    %s23 = sphi 0, %s21
    %s35 = sphi 0, %s37
    %s38 = sphi 0, %s35
    %s39 = sphi 0, %s38
    %s55 = sphi 0, %s39
    %s59 = sphi 0, %s59
    %s61 = sphi 0, %s59
    %s62 = sphi 0, %s61
    %s76 = sphi 0, %s62
    %s82 = sphi 0, %s84
    %s85 = sphi 0, %s82
    %s86 = sphi 0, %s85
    %s102 = sphi 0, %s86
    %s108 = sphi 0, %s110
    %s111 = sphi 0, %s108
    %s112 = sphi 0, %s111
    %s128 = sphi 0, %s112
    %s134 = sphi 0, %s136
    %s137 = sphi 0, %s134
    %s138 = sphi 0, %s137
    %s154 = sphi 0, %s138
  $region4: #{_lambda_.6} parent=0 // loop_header_branch
    %14 = sbr.rel (%p12) target = $region8
  $region5: #{_lambda_.6} parent=0 // loop_body
    %s16 = ssub.s32 %s11, 1
    %s17 = ssub.s32 %s11, 2
    %s24 = sadd.s32 1, %s19
    %p25 = scmp.ge.s32.totalorder %s24, 1
    %s26 = scalar_select %p25, 0, %s24
    %s27 = sadd.s32 1, %s18
    %s28 = scalar_select %p25, %s27, %s18
    %p29 = scmp.ge.s32.totalorder %s28, 2
    %s30 = scalar_select %p29, 0, %s28
    %s31 = ssub.s32 %s18, %s30
    %s32 = ssub.s32 %s19, %s26
    %s33 = sor.u32 %s31, %s32
    %p34 = scmp.eq.s32.totalorder %s33, 0
    %s36 = sadd.s32 %s35, 1
    %s37 = scalar_select %p34, %s35, %s36
    %p40 = pneg %p34
    %p41 = scmp.eq.s32.totalorder %s11, 1
    %p42 = por %p40, %p41
    %p43 = scmp.ne.s32.totalorder %s35, %s38
    %p44 = scmp.eq.s32.totalorder %s11, 0
    %p45 = por %p43, %p44
    %p46 = scmp.ne.s32.totalorder %s35, %s38
    %p47 = scmp.eq.s32.totalorder %s16, 1
    %p48 = por %p46, %p47
    %p49 = scmp.ne.s32.totalorder %s38, %s39
    %p50 = scmp.eq.s32.totalorder %s16, 0
    %p51 = por %p49, %p50
    %p52 = scmp.ne.s32.totalorder %s38, %s39
    %p53 = scmp.eq.s32.totalorder %s17, 1
    %p54 = por %p52, %p53
    %p56 = scmp.ne.s32.totalorder %s39, %s55
    %p57 = scmp.eq.s32.totalorder %s17, 0
    %p58 = por %p56, %p57
    %s60 = sadd.s32 %s59, 1
    %p63 = scmp.eq.s32.totalorder %s11, 1
    %p64 = scmp.ne.s32.totalorder %s59, %s61
    %p65 = scmp.eq.s32.totalorder %s11, 0
    %p66 = por %p64, %p65
    %p67 = scmp.ne.s32.totalorder %s59, %s61
    %p68 = scmp.eq.s32.totalorder %s16, 1
    %p69 = por %p67, %p68
    %p70 = scmp.ne.s32.totalorder %s61, %s62
    %p71 = scmp.eq.s32.totalorder %s16, 0
    %p72 = por %p70, %p71
    %p73 = scmp.ne.s32.totalorder %s61, %s62
    %p74 = scmp.eq.s32.totalorder %s17, 1
    %p75 = por %p73, %p74
    %p77 = scmp.ne.s32.totalorder %s62, %s76
    %p78 = scmp.eq.s32.totalorder %s17, 0
    %p79 = por %p77, %p78
    %s80 = ssub.s32 %s18, %s30
    %p81 = scmp.eq.s32.totalorder %s80, 0
    %s83 = sadd.s32 %s82, 1
    %s84 = scalar_select %p81, %s82, %s83
    %p87 = pneg %p81
    %p88 = scmp.eq.s32.totalorder %s11, 1
    %p89 = por %p87, %p88
    %p90 = scmp.ne.s32.totalorder %s82, %s85
    %p91 = scmp.eq.s32.totalorder %s11, 0
    %p92 = por %p90, %p91
    %p93 = scmp.ne.s32.totalorder %s82, %s85
    %p94 = scmp.eq.s32.totalorder %s16, 1
    %p95 = por %p93, %p94
    %p96 = scmp.ne.s32.totalorder %s85, %s86
    %p97 = scmp.eq.s32.totalorder %s16, 0
    %p98 = por %p96, %p97
    %p99 = scmp.ne.s32.totalorder %s85, %s86
    %p100 = scmp.eq.s32.totalorder %s17, 1
    %p101 = por %p99, %p100
    %p103 = scmp.ne.s32.totalorder %s86, %s102
    %p104 = scmp.eq.s32.totalorder %s17, 0
    %p105 = por %p103, %p104
    %s106 = ssub.s32 %s18, %s30
    %p107 = scmp.eq.s32.totalorder %s106, 0
    %s109 = sadd.s32 %s108, 1
    %s110 = scalar_select %p107, %s108, %s109
    %p113 = pneg %p107
    %p114 = scmp.eq.s32.totalorder %s11, 1
    %p115 = por %p113, %p114
    %p116 = scmp.ne.s32.totalorder %s108, %s111
    %p117 = scmp.eq.s32.totalorder %s11, 0
    %p118 = por %p116, %p117
    %p119 = scmp.ne.s32.totalorder %s108, %s111
    %p120 = scmp.eq.s32.totalorder %s16, 1
    %p121 = por %p119, %p120
    %p122 = scmp.ne.s32.totalorder %s111, %s112
    %p123 = scmp.eq.s32.totalorder %s16, 0
    %p124 = por %p122, %p123
    %p125 = scmp.ne.s32.totalorder %s111, %s112
    %p126 = scmp.eq.s32.totalorder %s17, 1
    %p127 = por %p125, %p126
    %p129 = scmp.ne.s32.totalorder %s112, %s128
    %p130 = scmp.eq.s32.totalorder %s17, 0
    %p131 = por %p129, %p130
    %s132 = ssub.s32 %s18, %s30
    %p133 = scmp.eq.s32.totalorder %s132, 0
    %s135 = sadd.s32 %s134, 1
    %s136 = scalar_select %p133, %s134, %s135
    %p139 = pneg %p133
    %p140 = scmp.eq.s32.totalorder %s11, 1
    %p141 = por %p139, %p140
    %p142 = scmp.ne.s32.totalorder %s134, %s137
    %p143 = scmp.eq.s32.totalorder %s11, 0
    %p144 = por %p142, %p143
    %p145 = scmp.ne.s32.totalorder %s134, %s137
    %p146 = scmp.eq.s32.totalorder %s16, 1
    %p147 = por %p145, %p146
    %p148 = scmp.ne.s32.totalorder %s137, %s138
    %p149 = scmp.eq.s32.totalorder %s16, 0
    %p150 = por %p148, %p149
    %p151 = scmp.ne.s32.totalorder %s137, %s138
    %p152 = scmp.eq.s32.totalorder %s17, 1
    %p153 = por %p151, %p152
    %p155 = scmp.ne.s32.totalorder %s138, %s154
    %p156 = scmp.eq.s32.totalorder %s17, 0
    %p157 = por %p155, %p156
    %p158 = scmp.le.s32.totalorder 1, %s11
    %p159 = scmp.lt.s32.totalorder %s11, 3
    %p160 = pnand %p158, %p159
    %p161 = pneg %p160
    // Predicated region
    $region9: #{_lambda_.6} parent=5 // pred_check
      _
    $region10: #{_lambda_.6} parent=5 // pred_check_branch
      %163 = sbr.rel (%p160) target = $region12
    $region11: #{_lambda_.6} parent=5 // pred_region
      %s164 = ssub.s32 %s11, 1
      // Predicated region
      $region13: #{_lambda_.6} parent=11 // pred_check
        %p165 = pneg %p72
      $region14: #{_lambda_.6} parent=11 // pred_check_branch
        %167 = sbr.rel (%p165) target = $region16
      $region15: #{_lambda_.6} parent=11 // pred_region
        _
      $region16: #{_lambda_.6} parent=11 // pred_fallthru
        _
    $region12: #{_lambda_.6} parent=5 // pred_fallthru
      _
    %p168 = scmp.lt.s32.totalorder %s11, 2
    // Predicated region
    $region17: #{_lambda_.6} parent=5 // pred_check
      %p169 = pneg %p168
    $region18: #{_lambda_.6} parent=5 // pred_check_branch
      %171 = sbr.rel (%p169) target = $region20
    $region19: #{_lambda_.6} parent=5 // pred_region
      // Predicated region
      $region21: #{_lambda_.6} parent=19 // pred_check
        %p172 = pneg %p45
      $region22: #{_lambda_.6} parent=19 // pred_check_branch
        %174 = sbr.rel (%p172) target = $region24
      $region23: #{_lambda_.6} parent=19 // pred_region
        %s175 = smul.u32 16, %s18
        %s176 = smul.u32 2, %s19
        %p177 = scmp.lt.s32.totalorder %s175, 31
        %s178 = scalar_select %p177, %s175, 31
        %p179 = scmp.lt.s32.totalorder %s176, 1
        %s180 = scalar_select %p179, %s176, 1
        %s181 = smul.addr %s178, 2
        %s182 = sadd.s32 %s180, %s181
        %s183 = smul.addr %s182, 4
        %s184 = scalar_lea.vmem %s0, %s183
        %s185 = smul.u32 16, %s18
        %s186 = smul.u32 2, %s19
      $region24: #{_lambda_.6} parent=19 // pred_fallthru
        _
    $region20: #{_lambda_.6} parent=5 // pred_fallthru
      _
    %p187 = scmp.le.s32.totalorder 1, %s11
    %p188 = scmp.lt.s32.totalorder %s11, 3
    %p189 = pnand %p187, %p188
    %p190 = pneg %p189
    // Predicated region
    $region25: #{_lambda_.6} parent=5 // pred_check
      _
    $region26: #{_lambda_.6} parent=5 // pred_check_branch
      %192 = sbr.rel (%p189) target = $region28
    $region27: #{_lambda_.6} parent=5 // pred_region
      %s193 = ssub.s32 %s11, 1
      %s194 = smul.u32 16, %s20
      %s195 = smul.u32 2, %s21
      %p196 = scmp.lt.s32.totalorder %s194, 31
      %s197 = scalar_select %p196, %s194, 31
      %p198 = scmp.lt.s32.totalorder %s195, 1
      %s199 = scalar_select %p198, %s195, 1
      %s200 = smul.addr %s197, 2
      %s201 = sadd.s32 %s199, %s200
      %s202 = smul.addr %s201, 4
      %s203 = scalar_lea.vmem %s0, %s202
      %p204 = pneg %p51
      %p205 = pneg %p48
      %p206 = pneg %p72
      %p207 = pneg %p69
      %p208 = pneg %p98
      %p209 = pneg %p95
      %s210 = smul.u32 16, %s20
      %p211 = scmp.lt.s32.totalorder %s210, 31
      %s212 = scalar_select %p211, %s210, 31
      %s213 = smul.addr %s212, 8
      %s214 = scalar_lea.vmem %s2, %s213
      %p215 = pneg %p124
      %p216 = pneg %p121
      %p217 = scmp.lt.s32.totalorder %s20, 1
      %s218 = scalar_select %p217, %s20, 1
      %s219 = smul.addr %s218, 8
      %s220 = scalar_lea.vmem %s3, %s219
      %p221 = pneg %p150
      %p222 = pneg %p147
      %p223 = scmp.lt.s32.totalorder %s20, 1
      %s224 = scalar_select %p223, %s20, 1
      %s225 = smul.addr %s224, 8
      %s226 = scalar_lea.vmem %s4, %s225
      %s227 = smul.u32 16, %s20
      %s228 = smul.u32 2, %s21
      %p229 = scmp.lt.s32.totalorder %s227, 31
      %s230 = scalar_select %p229, %s227, 31
      %p231 = scmp.lt.s32.totalorder %s228, 1
      %s232 = scalar_select %p231, %s228, 1
      %s233 = smul.addr %s230, 2
      %s234 = sadd.s32 %s232, %s233
      %s235 = smul.addr %s234, 4
      %s236 = scalar_lea.vmem %s0, %s235
      %s237 = smul.u32 16, %s20
      %s238 = smul.u32 2, %s21
      %s239 = smul.u32 16, %s20
      %p240 = scmp.lt.s32.totalorder %s239, 31
      %s241 = scalar_select %p240, %s239, 31
      %s242 = smul.addr %s241, 8
      %s243 = scalar_lea.vmem %s2, %s242
      %s244 = smul.u32 16, %s20
      %p245 = scmp.lt.s32.totalorder %s20, 1
      %s246 = scalar_select %p245, %s20, 1
      %s247 = smul.addr %s246, 8
      %s248 = scalar_lea.vmem %s3, %s247
      %p249 = scmp.lt.s32.totalorder %s20, 1
      %s250 = scalar_select %p249, %s20, 1
      %s251 = smul.addr %s250, 8
      %s252 = scalar_lea.vmem %s4, %s251
      %p254 = scmp.eq.s32.totalorder %s21, 0
      // Predicated region
      $region29: #{_lambda_.6} parent=27 // pred_check
        %p255 = pneg %p254
      $region30: #{_lambda_.6} parent=27 // pred_check_branch
        %257 = sbr.rel (%p255) target = $region32
      $region31: #{_lambda_.6} parent=27 // pred_region
        %258 = vst [vmem:[%s243] sm:$0xff] 0.0
        %259 = vst [vmem:[%s243 + $0x8] sm:$0xff] 0.0
        %260 = vst [vmem:[%s243 + $0x10] sm:$0xff] 0.0
        %261 = vst [vmem:[%s243 + $0x18] sm:$0xff] 0.0
        %262 = vst [vmem:[%s243 + $0x20] sm:$0xff] 0.0
        %263 = vst [vmem:[%s243 + $0x28] sm:$0xff] 0.0
        %264 = vst [vmem:[%s243 + $0x30] sm:$0xff] 0.0
        %265 = vst [vmem:[%s243 + $0x38] sm:$0xff] 0.0
        %266 = vst [vmem:[%s243 + $0x40] sm:$0xff] 0.0
        %267 = vst [vmem:[%s243 + $0x48] sm:$0xff] 0.0
        %268 = vst [vmem:[%s243 + $0x50] sm:$0xff] 0.0
        %269 = vst [vmem:[%s243 + $0x58] sm:$0xff] 0.0
        %270 = vst [vmem:[%s243 + $0x60] sm:$0xff] 0.0
        %271 = vst [vmem:[%s243 + $0x68] sm:$0xff] 0.0
        %272 = vst [vmem:[%s243 + $0x70] sm:$0xff] 0.0
        %273 = vst [vmem:[%s243 + $0x78] sm:$0xff] 0.0
        %274 = vst [vmem:[%s248] sm:$0xff] 0.0
        %275 = vst [vmem:[%s252] sm:$0xff] 0.0
      $region32: #{_lambda_.6} parent=27 // pred_fallthru
        _
      %s276 = smul.u32 %s21, 256
      %s277 = sshra.s32 %s276, 3
      %s278 = sand.u32 %s276, 7
      %s279 = smul.addr %s277, 4
      %s280 = scalar_lea.vmem %s1, %s279
      %v281 = vld [vmem:[%s280] sm:$0xf]
      %v282 = vld [vmem:[%s280 + $0x4] sm:$0xf]
      %v283 = vld [vmem:[%s280 + $0x8] sm:$0xf]
      %v284 = vld [vmem:[%s280 + $0xc] sm:$0xf]
      %v285 = vld [vmem:[%s280 + $0x10] sm:$0xf]
      %v286 = vld [vmem:[%s280 + $0x14] sm:$0xf]
      %v287 = vld [vmem:[%s280 + $0x18] sm:$0xf]
      %v288 = vld [vmem:[%s280 + $0x1c] sm:$0xf]
      %v289 = vld [vmem:[%s280 + $0x20] sm:$0xf]
      %v290 = vld [vmem:[%s280 + $0x24] sm:$0xf]
      %v291 = vld [vmem:[%s280 + $0x28] sm:$0xf]
      %v292 = vld [vmem:[%s280 + $0x2c] sm:$0xf]
      %v293 = vld [vmem:[%s280 + $0x30] sm:$0xf]
      %v294 = vld [vmem:[%s280 + $0x34] sm:$0xf]
      %v295 = vld [vmem:[%s280 + $0x38] sm:$0xf]
      %v296 = vld [vmem:[%s280 + $0x3c] sm:$0xf]
      %v297 = vld [vmem:[%s280 + $0x40] sm:$0xf]
      %v298 = vld [vmem:[%s280 + $0x44] sm:$0xf]
      %v299 = vld [vmem:[%s280 + $0x48] sm:$0xf]
      %v300 = vld [vmem:[%s280 + $0x4c] sm:$0xf]
      %v301 = vld [vmem:[%s280 + $0x50] sm:$0xf]
      %v302 = vld [vmem:[%s280 + $0x54] sm:$0xf]
      %v303 = vld [vmem:[%s280 + $0x58] sm:$0xf]
      %v304 = vld [vmem:[%s280 + $0x5c] sm:$0xf]
      %v305 = vld [vmem:[%s280 + $0x60] sm:$0xf]
      %v306 = vld [vmem:[%s280 + $0x64] sm:$0xf]
      %v307 = vld [vmem:[%s280 + $0x68] sm:$0xf]
      %v308 = vld [vmem:[%s280 + $0x6c] sm:$0xf]
      %v309 = vld [vmem:[%s280 + $0x70] sm:$0xf]
      %v310 = vld [vmem:[%s280 + $0x74] sm:$0xf]
      %v311 = vld [vmem:[%s280 + $0x78] sm:$0xf]
      %v312 = vld [vmem:[%s280 + $0x7c] sm:$0xf]
      %v313 = vld [vmem:[%s243] sm:$0xff]
      %v314 = vld [vmem:[%s243 + $0x8] sm:$0xff]
      %v315 = vld [vmem:[%s243 + $0x10] sm:$0xff]
      %v316 = vld [vmem:[%s243 + $0x18] sm:$0xff]
      %v317 = vld [vmem:[%s243 + $0x20] sm:$0xff]
      %v318 = vld [vmem:[%s243 + $0x28] sm:$0xff]
      %v319 = vld [vmem:[%s243 + $0x30] sm:$0xff]
      %v320 = vld [vmem:[%s243 + $0x38] sm:$0xff]
      %v321 = vld [vmem:[%s243 + $0x40] sm:$0xff]
      %v322 = vld [vmem:[%s243 + $0x48] sm:$0xff]
      %v323 = vld [vmem:[%s243 + $0x50] sm:$0xff]
      %v324 = vld [vmem:[%s243 + $0x58] sm:$0xff]
      %v325 = vld [vmem:[%s243 + $0x60] sm:$0xff]
      %v326 = vld [vmem:[%s243 + $0x68] sm:$0xff]
      %v327 = vld [vmem:[%s243 + $0x70] sm:$0xff]
      %v328 = vld [vmem:[%s243 + $0x78] sm:$0xff]
      %v329 = vld [vmem:[%s236] sm:$0xff]
      %v330 = vld [vmem:[%s236 + $0x8] sm:$0xff]
      %v331 = vld [vmem:[%s236 + $0x10] sm:$0xff]
      %v332 = vld [vmem:[%s236 + $0x18] sm:$0xff]
      %v333 = vld [vmem:[%s236 + $0x20] sm:$0xff]
      %v334 = vld [vmem:[%s236 + $0x28] sm:$0xff]
      %v335 = vld [vmem:[%s236 + $0x30] sm:$0xff]
      %v336 = vld [vmem:[%s236 + $0x38] sm:$0xff]
      %v337 = vld [vmem:[%s236 + $0x40] sm:$0xff]
      %v338 = vld [vmem:[%s236 + $0x48] sm:$0xff]
      %v339 = vld [vmem:[%s236 + $0x50] sm:$0xff]
      %v340 = vld [vmem:[%s236 + $0x58] sm:$0xff]
      %v341 = vld [vmem:[%s236 + $0x60] sm:$0xff]
      %v342 = vld [vmem:[%s236 + $0x68] sm:$0xff]
      %v343 = vld [vmem:[%s236 + $0x70] sm:$0xff]
      %v344 = vld [vmem:[%s236 + $0x78] sm:$0xff]
      %v361 = vunpack.c.l.b16 %v329
      %v362 = vunpack.c.h.b16 %v329
      %v363 = vunpack.c.l.b16 %v330
      %v364 = vunpack.c.h.b16 %v330
      %v365 = vunpack.c.l.b16 %v331
      %v366 = vunpack.c.h.b16 %v331
      %v367 = vunpack.c.l.b16 %v332
      %v368 = vunpack.c.h.b16 %v332
      %v369 = vunpack.c.l.b16 %v333
      %v370 = vunpack.c.h.b16 %v333
      %v371 = vunpack.c.l.b16 %v334
      %v372 = vunpack.c.h.b16 %v334
      %v373 = vunpack.c.l.b16 %v335
      %v374 = vunpack.c.h.b16 %v335
      %v375 = vunpack.c.l.b16 %v336
      %v376 = vunpack.c.h.b16 %v336
      %v377 = vunpack.c.l.b16 %v337
      %v378 = vunpack.c.h.b16 %v337
      %v379 = vunpack.c.l.b16 %v338
      %v380 = vunpack.c.h.b16 %v338
      %v381 = vunpack.c.l.b16 %v339
      %v382 = vunpack.c.h.b16 %v339
      %v383 = vunpack.c.l.b16 %v340
      %v384 = vunpack.c.h.b16 %v340
      %v385 = vunpack.c.l.b16 %v341
      %v386 = vunpack.c.h.b16 %v341
      %v387 = vunpack.c.l.b16 %v342
      %v388 = vunpack.c.h.b16 %v342
      %v389 = vunpack.c.l.b16 %v343
      %v390 = vunpack.c.h.b16 %v343
      %v391 = vunpack.c.l.b16 %v344
      %v392 = vunpack.c.h.b16 %v344
      %v393 = vpack.c.b16 %v363, %v361
      %v394 = vpack.c.b16 %v364, %v362
      %v395 = vpack.c.b16 %v367, %v365
      %v396 = vpack.c.b16 %v368, %v366
      %v397 = vpack.c.b16 %v371, %v369
      %v398 = vpack.c.b16 %v372, %v370
      %v399 = vpack.c.b16 %v375, %v373
      %v400 = vpack.c.b16 %v376, %v374
      %v401 = vpack.c.b16 %v379, %v377
      %v402 = vpack.c.b16 %v380, %v378
      %v403 = vpack.c.b16 %v383, %v381
      %v404 = vpack.c.b16 %v384, %v382
      %v405 = vpack.c.b16 %v387, %v385
      %v406 = vpack.c.b16 %v388, %v386
      %v407 = vpack.c.b16 %v391, %v389
      %v408 = vpack.c.b16 %v392, %v390
      %v457 = vunpack.c.l.b16 %v281
      %v458 = vunpack.c.l.b16 %v282
      %v459 = vunpack.c.l.b16 %v283
      %v460 = vunpack.c.l.b16 %v284
      %v461 = vunpack.c.l.b16 %v285
      %v462 = vunpack.c.l.b16 %v286
      %v463 = vunpack.c.l.b16 %v287
      %v464 = vunpack.c.l.b16 %v288
      %v465 = vunpack.c.l.b16 %v289
      %v466 = vunpack.c.l.b16 %v290
      %v467 = vunpack.c.l.b16 %v291
      %v468 = vunpack.c.l.b16 %v292
      %v469 = vunpack.c.l.b16 %v293
      %v470 = vunpack.c.l.b16 %v294
      %v471 = vunpack.c.l.b16 %v295
      %v472 = vunpack.c.l.b16 %v296
      %v473 = vunpack.c.l.b16 %v297
      %v474 = vunpack.c.l.b16 %v298
      %v475 = vunpack.c.l.b16 %v299
      %v476 = vunpack.c.l.b16 %v300
      %v477 = vunpack.c.l.b16 %v301
      %v478 = vunpack.c.l.b16 %v302
      %v479 = vunpack.c.l.b16 %v303
      %v480 = vunpack.c.l.b16 %v304
      %v481 = vunpack.c.l.b16 %v305
      %v482 = vunpack.c.l.b16 %v306
      %v483 = vunpack.c.l.b16 %v307
      %v484 = vunpack.c.l.b16 %v308
      %v485 = vunpack.c.l.b16 %v309
      %v486 = vunpack.c.l.b16 %v310
      %v487 = vunpack.c.l.b16 %v311
      %v488 = vunpack.c.l.b16 %v312
      %v489 = vpack.c.b16 %v458, %v457
      %v490 = vpack.c.b16 %v460, %v459
      %v491 = vpack.c.b16 %v462, %v461
      %v492 = vpack.c.b16 %v464, %v463
      %v493 = vpack.c.b16 %v466, %v465
      %v494 = vpack.c.b16 %v468, %v467
      %v495 = vpack.c.b16 %v470, %v469
      %v496 = vpack.c.b16 %v472, %v471
      %v497 = vpack.c.b16 %v474, %v473
      %v498 = vpack.c.b16 %v476, %v475
      %v499 = vpack.c.b16 %v478, %v477
      %v500 = vpack.c.b16 %v480, %v479
      %v501 = vpack.c.b16 %v482, %v481
      %v502 = vpack.c.b16 %v484, %v483
      %v503 = vpack.c.b16 %v486, %v485
      %v504 = vpack.c.b16 %v488, %v487
      %521 = vmatprep.subr.bf16.mxu0 0
      %522 = vmatpush1.bf16.msra.mxu0 %v489
      %523 = vmatprep.subr.bf16.mxu0 0
      %524 = vmatpush1.bf16.msra.mxu0 %v490
      %525 = vmatprep.subr.bf16.mxu0 0
      %526 = vmatpush1.bf16.msra.mxu0 %v491
      %527 = vmatprep.subr.bf16.mxu0 0
      %528 = vmatpush1.bf16.msra.mxu0 %v492
      %529 = vmatprep.subr.bf16.mxu0 0
      %530 = vmatpush1.bf16.msra.mxu0 %v493
      %531 = vmatprep.subr.bf16.mxu0 0
      %532 = vmatpush1.bf16.msra.mxu0 %v494
      %533 = vmatprep.subr.bf16.mxu0 0
      %534 = vmatpush1.bf16.msra.mxu0 %v495
      %535 = vmatprep.subr.bf16.mxu0 0
      %536 = vmatpush1.bf16.msra.mxu0 %v496
      %537 = vmatprep.subr.bf16.mxu0 0
      %538 = vmatpush1.bf16.msra.mxu0 %v497
      %539 = vmatprep.subr.bf16.mxu0 0
      %540 = vmatpush1.bf16.msra.mxu0 %v498
      %541 = vmatprep.subr.bf16.mxu0 0
      %542 = vmatpush1.bf16.msra.mxu0 %v499
      %543 = vmatprep.subr.bf16.mxu0 0
      %544 = vmatpush1.bf16.msra.mxu0 %v500
      %545 = vmatprep.subr.bf16.mxu0 0
      %546 = vmatpush1.bf16.msra.mxu0 %v501
      %547 = vmatprep.subr.bf16.mxu0 0
      %548 = vmatpush1.bf16.msra.mxu0 %v502
      %549 = vmatprep.subr.bf16.mxu0 0
      %550 = vmatpush1.bf16.msra.mxu0 %v503
      %551 = vmatprep.subr.bf16.mxu0 0
      %552 = vmatpush1.bf16.msra.mxu0 %v504
      %553 = vmatprep.mubr.bf16.mxu0 %v394
      %554 = vmatmul.mubr.bf16.gmra.mrb[0].mxu0 %v393
      %v555 = vpop.f32.mrb[0].mxu0
      %v556 = vadd.f32 0.0, %v555
      %v557 = vpop.f32.mrb[0].mxu0
      %v558 = vpop.f32.mrb[0].mxu0
      %v559 = vadd.f32 0.0, %v558
      %v560 = vpop.f32.mrb[0].mxu0
      %561 = vmatprep.mubr.bf16.mxu0 %v396
      %562 = vmatmul.mubr.bf16.gmra.mrb[0].mxu0 %v395
      %v563 = vpop.f32.mrb[0].mxu0
      %v564 = vadd.f32 0.0, %v563
      %v565 = vpop.f32.mrb[0].mxu0
      %v566 = vpop.f32.mrb[0].mxu0
      %v567 = vadd.f32 0.0, %v566
      %v568 = vpop.f32.mrb[0].mxu0
      %569 = vmatprep.mubr.bf16.mxu0 %v398
      %570 = vmatmul.mubr.bf16.gmra.mrb[0].mxu0 %v397
      %v571 = vpop.f32.mrb[0].mxu0
      %v572 = vadd.f32 0.0, %v571
      %v573 = vpop.f32.mrb[0].mxu0
      %v574 = vpop.f32.mrb[0].mxu0
      %v575 = vadd.f32 0.0, %v574
      %v576 = vpop.f32.mrb[0].mxu0
      %577 = vmatprep.mubr.bf16.mxu0 %v400
      %578 = vmatmul.mubr.bf16.gmra.mrb[0].mxu0 %v399
      %v579 = vpop.f32.mrb[0].mxu0
      %v580 = vadd.f32 0.0, %v579
      %v581 = vpop.f32.mrb[0].mxu0
      %v582 = vpop.f32.mrb[0].mxu0
      %v583 = vadd.f32 0.0, %v582
      %v584 = vpop.f32.mrb[0].mxu0
      %585 = vmatprep.mubr.bf16.mxu0 %v402
      %586 = vmatmul.mubr.bf16.gmra.mrb[0].mxu0 %v401
      %v587 = vpop.f32.mrb[0].mxu0
      %v588 = vadd.f32 0.0, %v587
      %v589 = vpop.f32.mrb[0].mxu0
      %v590 = vpop.f32.mrb[0].mxu0
      %v591 = vadd.f32 0.0, %v590
      %v592 = vpop.f32.mrb[0].mxu0
      %593 = vmatprep.mubr.bf16.mxu0 %v404
      %594 = vmatmul.mubr.bf16.gmra.mrb[0].mxu0 %v403
      %v595 = vpop.f32.mrb[0].mxu0
      %v596 = vadd.f32 0.0, %v595
      %v597 = vpop.f32.mrb[0].mxu0
      %v598 = vpop.f32.mrb[0].mxu0
      %v599 = vadd.f32 0.0, %v598
      %v600 = vpop.f32.mrb[0].mxu0
      %601 = vmatprep.mubr.bf16.mxu0 %v406
      %602 = vmatmul.mubr.bf16.gmra.mrb[0].mxu0 %v405
      %v603 = vpop.f32.mrb[0].mxu0
      %v604 = vadd.f32 0.0, %v603
      %v605 = vpop.f32.mrb[0].mxu0
      %v606 = vpop.f32.mrb[0].mxu0
      %v607 = vadd.f32 0.0, %v606
      %v608 = vpop.f32.mrb[0].mxu0
      %609 = vmatprep.mubr.bf16.mxu0 %v408
      %610 = vmatmul.mubr.bf16.gmra.mrb[0].mxu0 %v407
      %v611 = vpop.f32.mrb[0].mxu0
      %v612 = vadd.f32 0.0, %v611
      %v613 = vpop.f32.mrb[0].mxu0
      %v614 = vpop.f32.mrb[0].mxu0
      %v615 = vadd.f32 0.0, %v614
      %v616 = vpop.f32.mrb[0].mxu0
      %617 = vdwg.mxu0
      %v618 = vadd.f32 %v313, %v556
      %v619 = vadd.f32 %v314, %v559
      %v620 = vadd.f32 %v315, %v564
      %v621 = vadd.f32 %v316, %v567
      %v622 = vadd.f32 %v317, %v572
      %v623 = vadd.f32 %v318, %v575
      %v624 = vadd.f32 %v319, %v580
      %v625 = vadd.f32 %v320, %v583
      %v626 = vadd.f32 %v321, %v588
      %v627 = vadd.f32 %v322, %v591
      %v628 = vadd.f32 %v323, %v596
      %v629 = vadd.f32 %v324, %v599
      %v630 = vadd.f32 %v325, %v604
      %v631 = vadd.f32 %v326, %v607
      %v632 = vadd.f32 %v327, %v612
      %v633 = vadd.f32 %v328, %v615
      %634 = vst [vmem:[%s243] sm:$0xff] %v618
      %635 = vst [vmem:[%s243 + $0x8] sm:$0xff] %v619
      %636 = vst [vmem:[%s243 + $0x10] sm:$0xff] %v620
      %637 = vst [vmem:[%s243 + $0x18] sm:$0xff] %v621
      %638 = vst [vmem:[%s243 + $0x20] sm:$0xff] %v622
      %639 = vst [vmem:[%s243 + $0x28] sm:$0xff] %v623
      %640 = vst [vmem:[%s243 + $0x30] sm:$0xff] %v624
      %641 = vst [vmem:[%s243 + $0x38] sm:$0xff] %v625
      %642 = vst [vmem:[%s243 + $0x40] sm:$0xff] %v626
      %643 = vst [vmem:[%s243 + $0x48] sm:$0xff] %v627
      %644 = vst [vmem:[%s243 + $0x50] sm:$0xff] %v628
      %645 = vst [vmem:[%s243 + $0x58] sm:$0xff] %v629
      %646 = vst [vmem:[%s243 + $0x60] sm:$0xff] %v630
      %647 = vst [vmem:[%s243 + $0x68] sm:$0xff] %v631
      %648 = vst [vmem:[%s243 + $0x70] sm:$0xff] %v632
      %649 = vst [vmem:[%s243 + $0x78] sm:$0xff] %v633
      // Predicated region
      $region33: #{_lambda_.6} parent=27 // pred_check
        %p650 = pneg %p254
      $region34: #{_lambda_.6} parent=27 // pred_check_branch
        %652 = sbr.rel (%p650) target = $region36
      $region35: #{_lambda_.6} parent=27 // pred_region
        %v653 = vld [vmem:[%s243] sm:$0xff]
        %v654 = vld [vmem:[%s243 + $0x8] sm:$0xff]
        %v655 = vld [vmem:[%s243 + $0x10] sm:$0xff]
        %v656 = vld [vmem:[%s243 + $0x18] sm:$0xff]
        %v657 = vld [vmem:[%s243 + $0x20] sm:$0xff]
        %v658 = vld [vmem:[%s243 + $0x28] sm:$0xff]
        %v659 = vld [vmem:[%s243 + $0x30] sm:$0xff]
        %v660 = vld [vmem:[%s243 + $0x38] sm:$0xff]
        %v661 = vld [vmem:[%s243 + $0x40] sm:$0xff]
        %v662 = vld [vmem:[%s243 + $0x48] sm:$0xff]
        %v663 = vld [vmem:[%s243 + $0x50] sm:$0xff]
        %v664 = vld [vmem:[%s243 + $0x58] sm:$0xff]
        %v665 = vld [vmem:[%s243 + $0x60] sm:$0xff]
        %v666 = vld [vmem:[%s243 + $0x68] sm:$0xff]
        %v667 = vld [vmem:[%s243 + $0x70] sm:$0xff]
        %v668 = vld [vmem:[%s243 + $0x78] sm:$0xff]
        %v669 = vadd.f32 %v653, %v654
        %v670 = vadd.f32 %v669, %v655
        %v671 = vadd.f32 %v670, %v656
        %v672 = vadd.f32 %v671, %v657
        %v673 = vadd.f32 %v672, %v658
        %v674 = vadd.f32 %v673, %v659
        %v675 = vadd.f32 %v674, %v660
        %v676 = vadd.f32 %v675, %v661
        %v677 = vadd.f32 %v676, %v662
        %v678 = vadd.f32 %v677, %v663
        %v679 = vadd.f32 %v678, %v664
        %v680 = vadd.f32 %v679, %v665
        %v681 = vadd.f32 %v680, %v666
        %v682 = vadd.f32 %v681, %v667
        %v683 = vadd.f32 %v682, %v668
        %v684 = vrot.slane %v683, 4
        %v685 = vadd.f32 %v683, %v684
        %v686 = vrot.slane %v685, 2
        %v687 = vadd.f32 %v685, %v686
        %v688 = vrot.slane %v687, 1
        %v689 = vadd.f32 %v687, %v688
        %690 = vst [vmem:[%s248] sm:$0x1] %v689
        %v691 = vmul.f32 %v653, %v653
        %v692 = vmul.f32 %v654, %v654
        %v693 = vmul.f32 %v655, %v655
        %v694 = vmul.f32 %v656, %v656
        %v695 = vmul.f32 %v657, %v657
        %v696 = vmul.f32 %v658, %v658
        %v697 = vmul.f32 %v659, %v659
        %v698 = vmul.f32 %v660, %v660
        %v699 = vmul.f32 %v661, %v661
        %v700 = vmul.f32 %v662, %v662
        %v701 = vmul.f32 %v663, %v663
        %v702 = vmul.f32 %v664, %v664
        %v703 = vmul.f32 %v665, %v665
        %v704 = vmul.f32 %v666, %v666
        %v705 = vmul.f32 %v667, %v667
        %v706 = vmul.f32 %v668, %v668
        %v707 = vadd.f32 %v691, %v692
        %v708 = vadd.f32 %v707, %v693
        %v709 = vadd.f32 %v708, %v694
        %v710 = vadd.f32 %v709, %v695
        %v711 = vadd.f32 %v710, %v696
        %v712 = vadd.f32 %v711, %v697
        %v713 = vadd.f32 %v712, %v698
        %v714 = vadd.f32 %v713, %v699
        %v715 = vadd.f32 %v714, %v700
        %v716 = vadd.f32 %v715, %v701
        %v717 = vadd.f32 %v716, %v702
        %v718 = vadd.f32 %v717, %v703
        %v719 = vadd.f32 %v718, %v704
        %v720 = vadd.f32 %v719, %v705
        %v721 = vadd.f32 %v720, %v706
        %v722 = vrot.slane %v721, 4
        %v723 = vadd.f32 %v721, %v722
        %v724 = vrot.slane %v723, 2
        %v725 = vadd.f32 %v723, %v724
        %v726 = vrot.slane %v725, 1
        %v727 = vadd.f32 %v725, %v726
        %728 = vst [vmem:[%s252] sm:$0x1] %v727
      $region36: #{_lambda_.6} parent=27 // pred_fallthru
        _
      %s729 = smul.u32 16, %s20
      %p730 = scmp.lt.s32.totalorder %s729, 31
      %s731 = scalar_select %p730, %s729, 31
      %s732 = smul.addr %s731, 8
      %s733 = scalar_lea.vmem %s2, %s732
      %p734 = scmp.lt.s32.totalorder %s20, 1
      %s735 = scalar_select %p734, %s20, 1
      %s736 = smul.addr %s735, 8
      %s737 = scalar_lea.vmem %s3, %s736
      %p738 = scmp.lt.s32.totalorder %s20, 1
      %s739 = scalar_select %p738, %s20, 1
      %s740 = smul.addr %s739, 8
      %s741 = scalar_lea.vmem %s4, %s740
      // Predicated region
      $region37: #{_lambda_.6} parent=27 // pred_check
        %p742 = pneg %p95
      $region38: #{_lambda_.6} parent=27 // pred_check_branch
        %744 = sbr.rel (%p742) target = $region40
      $region39: #{_lambda_.6} parent=27 // pred_region
        %s745 = smul.u32 16, %s20
      $region40: #{_lambda_.6} parent=27 // pred_fallthru
        _
      // Predicated region
      $region41: #{_lambda_.6} parent=27 // pred_check
        %p746 = pneg %p121
      $region42: #{_lambda_.6} parent=27 // pred_check_branch
        %748 = sbr.rel (%p746) target = $region44
      $region43: #{_lambda_.6} parent=27 // pred_region
        _
      $region44: #{_lambda_.6} parent=27 // pred_fallthru
        _
      // Predicated region
      $region45: #{_lambda_.6} parent=27 // pred_check
        %p749 = pneg %p147
      $region46: #{_lambda_.6} parent=27 // pred_check_branch
        %751 = sbr.rel (%p749) target = $region48
      $region47: #{_lambda_.6} parent=27 // pred_region
        _
      $region48: #{_lambda_.6} parent=27 // pred_fallthru
        _
    $region28: #{_lambda_.6} parent=5 // pred_fallthru
      _
    %p752 = scmp.le.s32.totalorder 2, %s11
    // Predicated region
    $region49: #{_lambda_.6} parent=5 // pred_check
      %p753 = pneg %p752
    $region50: #{_lambda_.6} parent=5 // pred_check_branch
      %755 = sbr.rel (%p753) target = $region52
    $region51: #{_lambda_.6} parent=5 // pred_region
      %s756 = ssub.s32 %s11, 2
      // Predicated region
      $region53: #{_lambda_.6} parent=51 // pred_check
        %p757 = pneg %p101
      $region54: #{_lambda_.6} parent=51 // pred_check_branch
        %759 = sbr.rel (%p757) target = $region56
      $region55: #{_lambda_.6} parent=51 // pred_region
        %s760 = smul.u32 16, %s22
        %p761 = scmp.lt.s32.totalorder %s760, 31
        %s762 = scalar_select %p761, %s760, 31
        %s763 = smul.addr %s762, 8
        %s764 = scalar_lea.vmem %s2, %s763
      $region56: #{_lambda_.6} parent=51 // pred_fallthru
        _
      // Predicated region
      $region57: #{_lambda_.6} parent=51 // pred_check
        %p765 = pneg %p127
      $region58: #{_lambda_.6} parent=51 // pred_check_branch
        %767 = sbr.rel (%p765) target = $region60
      $region59: #{_lambda_.6} parent=51 // pred_region
        %p768 = scmp.lt.s32.totalorder %s22, 1
        %s769 = scalar_select %p768, %s22, 1
        %s770 = smul.addr %s769, 8
        %s771 = scalar_lea.vmem %s3, %s770
      $region60: #{_lambda_.6} parent=51 // pred_fallthru
        _
      // Predicated region
      $region61: #{_lambda_.6} parent=51 // pred_check
        %p772 = pneg %p153
      $region62: #{_lambda_.6} parent=51 // pred_check_branch
        %774 = sbr.rel (%p772) target = $region64
      $region63: #{_lambda_.6} parent=51 // pred_region
        %p775 = scmp.lt.s32.totalorder %s22, 1
        %s776 = scalar_select %p775, %s22, 1
        %s777 = smul.addr %s776, 8
        %s778 = scalar_lea.vmem %s4, %s777
      $region64: #{_lambda_.6} parent=51 // pred_fallthru
        _
    $region52: #{_lambda_.6} parent=5 // pred_fallthru
      _
  $region6: #{_lambda_.6} parent=0 // loop_footer
    %s15 = sadd.s32 1, %s11
  $region7: #{_lambda_.6} parent=0 // loop_footer_branch
    %10 = sbr.rel target = $region3
  $region8: #{_lambda_.6} parent=0 // loop_exit
    _

// kernel: _lambda_.9
$region0: #{_lambda_.9}
  #allocation0 [shape = 'u32[]', space=smem, size = 0x4, offset = 0x4, fixed_abs, tag = 'smem constant byte address 0x4 - core index']
  #allocation1 [shape = 'u32[144,128]{1,0:T(1,128)}', space=vmem, size = 0x12000, scoped, tag = 'internal scratch']
  %s0 = inlined_call_operand.vmem [shape: f32[256,128], index: 0, kind: input, shape index: {}]
  %s1 = inlined_call_operand.vmem [shape: f32[1,128], index: 1, kind: input, shape index: {}]
  %s2 = inlined_call_operand.vmem [shape: f32[1,128], index: 2, kind: input, shape index: {}]
  %s3 = inlined_call_operand.vmem [shape: f32[256,128], index: 3, kind: output, shape index: {}]
  %s4 = sld [smem:[#allocation0]]
  $region45: #{_lambda_.9} parent=0
    _
  %s6 = ssub.s32 1, %s4
  %s7 = scalar_select 0, %s6, %s4
  loop: start=0, step=1, limit=4
  $region2: #{_lambda_.9} parent=0 // loop_pre_header
    _
  $region3: #{_lambda_.9} parent=0 // loop_header
    %s9 = sphi 0, %s13
    %p10 = scmp.ge.s32.totalorder %s9, 4
    %s19 = sphi 0, %s21
    %s22 = sphi 0, %s19
    %s23 = sphi 0, %s22
    %s39 = sphi 0, %s23
    %s43 = sphi 0, %s43
    %s45 = sphi 0, %s43
    %s46 = sphi 0, %s45
    %s60 = sphi 0, %s46
    %s64 = sphi 0, %s64
    %s66 = sphi 0, %s64
    %s67 = sphi 0, %s66
    %s81 = sphi 0, %s67
    %s87 = sphi 0, %s89
    %s90 = sphi 0, %s87
    %s91 = sphi 0, %s90
    %s107 = sphi 0, %s91
  $region4: #{_lambda_.9} parent=0 // loop_header_branch
    %12 = sbr.rel (%p10) target = $region8
  $region5: #{_lambda_.9} parent=0 // loop_body
    %s14 = ssub.s32 %s9, 1
    %s15 = ssub.s32 %s9, 2
    %s16 = sadd.s32 %s9, 1
    %s17 = ssub.s32 %s9, %s16
    %p18 = scmp.eq.s32.totalorder %s17, 0
    %s20 = sadd.s32 %s19, 1
    %s21 = scalar_select %p18, %s19, %s20
    %p24 = pneg %p18
    %p25 = scmp.eq.s32.totalorder %s9, 1
    %p26 = por %p24, %p25
    %p27 = scmp.ne.s32.totalorder %s19, %s22
    %p28 = scmp.eq.s32.totalorder %s9, 0
    %p29 = por %p27, %p28
    %p30 = scmp.ne.s32.totalorder %s19, %s22
    %p31 = scmp.eq.s32.totalorder %s14, 1
    %p32 = por %p30, %p31
    %p33 = scmp.ne.s32.totalorder %s22, %s23
    %p34 = scmp.eq.s32.totalorder %s14, 0
    %p35 = por %p33, %p34
    %p36 = scmp.ne.s32.totalorder %s22, %s23
    %p37 = scmp.eq.s32.totalorder %s15, 1
    %p38 = por %p36, %p37
    %p40 = scmp.ne.s32.totalorder %s23, %s39
    %p41 = scmp.eq.s32.totalorder %s15, 0
    %p42 = por %p40, %p41
    %s44 = sadd.s32 %s43, 1
    %p47 = scmp.eq.s32.totalorder %s9, 1
    %p48 = scmp.ne.s32.totalorder %s43, %s45
    %p49 = scmp.eq.s32.totalorder %s9, 0
    %p50 = por %p48, %p49
    %p51 = scmp.ne.s32.totalorder %s43, %s45
    %p52 = scmp.eq.s32.totalorder %s14, 1
    %p53 = por %p51, %p52
    %p54 = scmp.ne.s32.totalorder %s45, %s46
    %p55 = scmp.eq.s32.totalorder %s14, 0
    %p56 = por %p54, %p55
    %p57 = scmp.ne.s32.totalorder %s45, %s46
    %p58 = scmp.eq.s32.totalorder %s15, 1
    %p59 = por %p57, %p58
    %p61 = scmp.ne.s32.totalorder %s46, %s60
    %p62 = scmp.eq.s32.totalorder %s15, 0
    %p63 = por %p61, %p62
    %s65 = sadd.s32 %s64, 1
    %p68 = scmp.eq.s32.totalorder %s9, 1
    %p69 = scmp.ne.s32.totalorder %s64, %s66
    %p70 = scmp.eq.s32.totalorder %s9, 0
    %p71 = por %p69, %p70
    %p72 = scmp.ne.s32.totalorder %s64, %s66
    %p73 = scmp.eq.s32.totalorder %s14, 1
    %p74 = por %p72, %p73
    %p75 = scmp.ne.s32.totalorder %s66, %s67
    %p76 = scmp.eq.s32.totalorder %s14, 0
    %p77 = por %p75, %p76
    %p78 = scmp.ne.s32.totalorder %s66, %s67
    %p79 = scmp.eq.s32.totalorder %s15, 1
    %p80 = por %p78, %p79
    %p82 = scmp.ne.s32.totalorder %s67, %s81
    %p83 = scmp.eq.s32.totalorder %s15, 0
    %p84 = por %p82, %p83
    %s85 = ssub.s32 %s9, %s16
    %p86 = scmp.eq.s32.totalorder %s85, 0
    %s88 = sadd.s32 %s87, 1
    %s89 = scalar_select %p86, %s87, %s88
    %p92 = pneg %p86
    %p93 = scmp.eq.s32.totalorder %s9, 1
    %p94 = por %p92, %p93
    %p95 = scmp.ne.s32.totalorder %s87, %s90
    %p96 = scmp.eq.s32.totalorder %s9, 0
    %p97 = por %p95, %p96
    %p98 = scmp.ne.s32.totalorder %s87, %s90
    %p99 = scmp.eq.s32.totalorder %s14, 1
    %p100 = por %p98, %p99
    %p101 = scmp.ne.s32.totalorder %s90, %s91
    %p102 = scmp.eq.s32.totalorder %s14, 0
    %p103 = por %p101, %p102
    %p104 = scmp.ne.s32.totalorder %s90, %s91
    %p105 = scmp.eq.s32.totalorder %s15, 1
    %p106 = por %p104, %p105
    %p108 = scmp.ne.s32.totalorder %s91, %s107
    %p109 = scmp.eq.s32.totalorder %s15, 0
    %p110 = por %p108, %p109
    %p111 = scmp.le.s32.totalorder 1, %s9
    %p112 = scmp.lt.s32.totalorder %s9, 3
    %p113 = pnand %p111, %p112
    %p114 = pneg %p113
    // Predicated region
    $region9: #{_lambda_.9} parent=5 // pred_check
      _
    $region10: #{_lambda_.9} parent=5 // pred_check_branch
      %116 = sbr.rel (%p113) target = $region12
    $region11: #{_lambda_.9} parent=5 // pred_region
      %s117 = ssub.s32 %s9, 1
      // Predicated region
      $region13: #{_lambda_.9} parent=11 // pred_check
        %p118 = pneg %p56
      $region14: #{_lambda_.9} parent=11 // pred_check_branch
        %120 = sbr.rel (%p118) target = $region16
      $region15: #{_lambda_.9} parent=11 // pred_region
        _
      $region16: #{_lambda_.9} parent=11 // pred_fallthru
        _
      // Predicated region
      $region17: #{_lambda_.9} parent=11 // pred_check
        %p121 = pneg %p77
      $region18: #{_lambda_.9} parent=11 // pred_check_branch
        %123 = sbr.rel (%p121) target = $region20
      $region19: #{_lambda_.9} parent=11 // pred_region
        _
      $region20: #{_lambda_.9} parent=11 // pred_fallthru
        _
    $region12: #{_lambda_.9} parent=5 // pred_fallthru
      _
    %p124 = scmp.lt.s32.totalorder %s9, 2
    // Predicated region
    $region21: #{_lambda_.9} parent=5 // pred_check
      %p125 = pneg %p124
    $region22: #{_lambda_.9} parent=5 // pred_check_branch
      %127 = sbr.rel (%p125) target = $region24
    $region23: #{_lambda_.9} parent=5 // pred_region
      // Predicated region
      $region25: #{_lambda_.9} parent=23 // pred_check
        %p128 = pneg %p29
      $region26: #{_lambda_.9} parent=23 // pred_check_branch
        %130 = sbr.rel (%p128) target = $region28
      $region27: #{_lambda_.9} parent=23 // pred_region
        %s131 = smul.u32 16, %s9
        %p132 = scmp.lt.s32.totalorder %s131, 31
        %s133 = scalar_select %p132, %s131, 31
        %s134 = smul.addr %s133, 8
        %s135 = scalar_lea.vmem %s0, %s134
        %s136 = smul.u32 16, %s9
      $region28: #{_lambda_.9} parent=23 // pred_fallthru
        _
    $region24: #{_lambda_.9} parent=5 // pred_fallthru
      _
    %p137 = scmp.le.s32.totalorder 1, %s9
    %p138 = scmp.lt.s32.totalorder %s9, 3
    %p139 = pnand %p137, %p138
    %p140 = pneg %p139
    // Predicated region
    $region29: #{_lambda_.9} parent=5 // pred_check
      _
    $region30: #{_lambda_.9} parent=5 // pred_check_branch
      %142 = sbr.rel (%p139) target = $region32
    $region31: #{_lambda_.9} parent=5 // pred_region
      %s143 = ssub.s32 %s9, 1
      %s144 = smul.u32 16, %s14
      %p145 = scmp.lt.s32.totalorder %s144, 31
      %s146 = scalar_select %p145, %s144, 31
      %s147 = smul.addr %s146, 8
      %s148 = scalar_lea.vmem %s0, %s147
      %p149 = pneg %p35
      %p150 = pneg %p32
      %p151 = pneg %p56
      %p152 = pneg %p53
      %p153 = pneg %p77
      %p154 = pneg %p74
      %p155 = pneg %p103
      %p156 = pneg %p100
      %s157 = smul.u32 16, %s14
      %p158 = scmp.lt.s32.totalorder %s157, 31
      %s159 = scalar_select %p158, %s157, 31
      %s160 = smul.addr %s159, 8
      %s161 = scalar_lea.vmem %s3, %s160
      %s162 = smul.u32 16, %s14
      %p163 = scmp.lt.s32.totalorder %s162, 31
      %s164 = scalar_select %p163, %s162, 31
      %s165 = smul.addr %s164, 8
      %s166 = scalar_lea.vmem %s0, %s165
      %s167 = smul.u32 16, %s14
      %s168 = smul.u32 16, %s14
      %p169 = scmp.lt.s32.totalorder %s168, 31
      %s170 = scalar_select %p169, %s168, 31
      %s171 = smul.addr %s170, 8
      %s172 = scalar_lea.vmem %s3, %s171
      %s173 = smul.u32 16, %s14
      %v174 = vld [vmem:[%s166] sm:$0xff]
      %v175 = vld [vmem:[%s166 + $0x8] sm:$0xff]
      %v176 = vld [vmem:[%s166 + $0x10] sm:$0xff]
      %v177 = vld [vmem:[%s166 + $0x18] sm:$0xff]
      %v178 = vld [vmem:[%s166 + $0x20] sm:$0xff]
      %v179 = vld [vmem:[%s166 + $0x28] sm:$0xff]
      %v180 = vld [vmem:[%s166 + $0x30] sm:$0xff]
      %v181 = vld [vmem:[%s166 + $0x38] sm:$0xff]
      %v182 = vld [vmem:[%s166 + $0x40] sm:$0xff]
      %v183 = vld [vmem:[%s166 + $0x48] sm:$0xff]
      %v184 = vld [vmem:[%s166 + $0x50] sm:$0xff]
      %v185 = vld [vmem:[%s166 + $0x58] sm:$0xff]
      %v186 = vld [vmem:[%s166 + $0x60] sm:$0xff]
      %v187 = vld [vmem:[%s166 + $0x68] sm:$0xff]
      %v188 = vld [vmem:[%s166 + $0x70] sm:$0xff]
      %v189 = vld [vmem:[%s166 + $0x78] sm:$0xff]
      %v190 = vld [vmem:[%s1] sm:$0x1]
      %v192 = vlaneseq
      %v193 = vshrl.u32 %v192, 7
      %v194 = vsub.s32 0, %v193
      %v195 = vrot.slane %v190, %v194
      %v197 = vmul.f32 %v174, %v195
      %v198 = vmul.f32 %v175, %v195
      %v199 = vmul.f32 %v176, %v195
      %v200 = vmul.f32 %v177, %v195
      %v201 = vmul.f32 %v178, %v195
      %v202 = vmul.f32 %v179, %v195
      %v203 = vmul.f32 %v180, %v195
      %v204 = vmul.f32 %v181, %v195
      %v205 = vmul.f32 %v182, %v195
      %v206 = vmul.f32 %v183, %v195
      %v207 = vmul.f32 %v184, %v195
      %v208 = vmul.f32 %v185, %v195
      %v209 = vmul.f32 %v186, %v195
      %v210 = vmul.f32 %v187, %v195
      %v211 = vmul.f32 %v188, %v195
      %v212 = vmul.f32 %v189, %v195
      %v213 = vld [vmem:[%s2] sm:$0x1]
      %v215 = vlaneseq
      %v216 = vshrl.u32 %v215, 7
      %v217 = vsub.s32 0, %v216
      %v218 = vrot.slane %v213, %v217
      %v220 = vadd.f32 %v197, %v218
      %v221 = vadd.f32 %v198, %v218
      %v222 = vadd.f32 %v199, %v218
      %v223 = vadd.f32 %v200, %v218
      %v224 = vadd.f32 %v201, %v218
      %v225 = vadd.f32 %v202, %v218
      %v226 = vadd.f32 %v203, %v218
      %v227 = vadd.f32 %v204, %v218
      %v228 = vadd.f32 %v205, %v218
      %v229 = vadd.f32 %v206, %v218
      %v230 = vadd.f32 %v207, %v218
      %v231 = vadd.f32 %v208, %v218
      %v232 = vadd.f32 %v209, %v218
      %v233 = vadd.f32 %v210, %v218
      %v234 = vadd.f32 %v211, %v218
      %v235 = vadd.f32 %v212, %v218
      %236 = vst [vmem:[%s172] sm:$0xff] %v220
      %237 = vst [vmem:[%s172 + $0x8] sm:$0xff] %v221
      %238 = vst [vmem:[%s172 + $0x10] sm:$0xff] %v222
      %239 = vst [vmem:[%s172 + $0x18] sm:$0xff] %v223
      %240 = vst [vmem:[%s172 + $0x20] sm:$0xff] %v224
      %241 = vst [vmem:[%s172 + $0x28] sm:$0xff] %v225
      %242 = vst [vmem:[%s172 + $0x30] sm:$0xff] %v226
      %243 = vst [vmem:[%s172 + $0x38] sm:$0xff] %v227
      %244 = vst [vmem:[%s172 + $0x40] sm:$0xff] %v228
      %245 = vst [vmem:[%s172 + $0x48] sm:$0xff] %v229
      %246 = vst [vmem:[%s172 + $0x50] sm:$0xff] %v230
      %247 = vst [vmem:[%s172 + $0x58] sm:$0xff] %v231
      %248 = vst [vmem:[%s172 + $0x60] sm:$0xff] %v232
      %249 = vst [vmem:[%s172 + $0x68] sm:$0xff] %v233
      %250 = vst [vmem:[%s172 + $0x70] sm:$0xff] %v234
      %251 = vst [vmem:[%s172 + $0x78] sm:$0xff] %v235
      %s252 = smul.u32 16, %s14
      %p253 = scmp.lt.s32.totalorder %s252, 31
      %s254 = scalar_select %p253, %s252, 31
      %s255 = smul.addr %s254, 8
      %s256 = scalar_lea.vmem %s3, %s255
      // Predicated region
      $region33: #{_lambda_.9} parent=31 // pred_check
        %p257 = pneg %p100
      $region34: #{_lambda_.9} parent=31 // pred_check_branch
        %259 = sbr.rel (%p257) target = $region36
      $region35: #{_lambda_.9} parent=31 // pred_region
        %s260 = smul.u32 16, %s14
      $region36: #{_lambda_.9} parent=31 // pred_fallthru
        _
    $region32: #{_lambda_.9} parent=5 // pred_fallthru
      _
    %p261 = scmp.le.s32.totalorder 2, %s9
    // Predicated region
    $region37: #{_lambda_.9} parent=5 // pred_check
      %p262 = pneg %p261
    $region38: #{_lambda_.9} parent=5 // pred_check_branch
      %264 = sbr.rel (%p262) target = $region40
    $region39: #{_lambda_.9} parent=5 // pred_region
      %s265 = ssub.s32 %s9, 2
      // Predicated region
      $region41: #{_lambda_.9} parent=39 // pred_check
        %p266 = pneg %p106
      $region42: #{_lambda_.9} parent=39 // pred_check_branch
        %268 = sbr.rel (%p266) target = $region44
      $region43: #{_lambda_.9} parent=39 // pred_region
        %s269 = smul.u32 16, %s15
        %p270 = scmp.lt.s32.totalorder %s269, 31
        %s271 = scalar_select %p270, %s269, 31
        %s272 = smul.addr %s271, 8
        %s273 = scalar_lea.vmem %s3, %s272
      $region44: #{_lambda_.9} parent=39 // pred_fallthru
        _
    $region40: #{_lambda_.9} parent=5 // pred_fallthru
      _
  $region6: #{_lambda_.9} parent=0 // loop_footer
    %s13 = sadd.s32 1, %s9
  $region7: #{_lambda_.9} parent=0 // loop_footer_branch
    %8 = sbr.rel target = $region3
  $region8: #{_lambda_.9} parent=0 // loop_exit
    _

</llo_original>
